<compile_context>
chip_gen: v7x
topology: tpu7x:2x2x1
jax: 0.10.0
libtpu: 0.0.40
codegen_flags: <defaults>
</compile_context>

<pallas_src>
import functools

import jax
import jax.numpy as jnp
from jax import lax
from jax.experimental import pallas as pl
from jax.experimental.pallas import tpu as pltpu

KH = 5                             # conv kernel height
_LANE = 128                        # TPU lane width
_STEP_TARGET = 2 * 1024 * 1024     # ~2 MiB of (in + out) HBM traffic per grid step
_MAX_BN = 8                        # cap on the static in-kernel batch unroll


def _largest_divisor_leq(n, cap):
    cap = int(max(1, min(n, cap)))
    for d in range(cap, 0, -1):
        if n % d == 0:
            return d
    return 1


def _plan(n, c, oc, h, ho, w, itemsize):
    """Pick (bn, tw, n_wt, tiled).  `w` is already a multiple of 128."""
    per_batch = (c * h + oc * ho) * w * itemsize
    if per_batch <= _STEP_TARGET:
        # Flat path: whole (H*W) plane on the lane axis; batch several images
        # per grid step so each step moves a fat block.
        bn = _largest_divisor_leq(n, min(_MAX_BN, _STEP_TARGET // per_batch))
        if n >= 2 and n // bn < 2:        # keep >=2 parallel steps (v7x: 2 TCs)
            bn = _largest_divisor_leq(n, n // 2)
        return bn, w, 1, False
    # Tiled path (very wide rows): one image per step, W tiled in 128-lane
    # multiples sized to the step target (halo-free: the conv only mixes H).
    per_col = (c * h + oc * ho) * itemsize
    max_tw = max(_LANE, (_STEP_TARGET // per_col) // _LANE * _LANE)
    tw = _LANE
    for cand in range(int(max_tw), _LANE - 1, -_LANE):
        if w % cand == 0:
            tw = cand
            break
    return 1, tw, w // tw, True


def _frame_feature_kernel(scale_ref, shift_ref, x_ref, w_ref, o_ref, *,
                          bn, h, ho, tw, tiled):
    """Fused BN(eval) + ReLU + (KH,1) VALID conv for one grid block.

    scale_ref, shift_ref : VMEM (C, 1) f32   folded BatchNorm scale / shift
    w_ref                : VMEM (KH, OC, C) f32, w_ref[kh] = tap kh (OC, C)
    x_ref  : (BN, C, H*TW)  [flat]   or (1, C, H, TW)   [tiled]
    o_ref  : (BN, OC, Ho*TW) [flat]  or (1, OC, Ho, TW) [tiled]
    TW is always a multiple of 128, so every tap slice below is a lane-aligned
    free view and the flat-path output store is lane-dense and unmasked.
    """
    c = scale_ref.shape[0]
    oc = w_ref.shape[1]
    scale = scale_ref[...]                                   # (C, 1)
    shift = shift_ref[...]

    if tiled:
        # bn == 1.  One (sublane->lane) merge relayout of the block, then all
        # taps are free 128-aligned lane views of the flat slab.
        x2 = x_ref[0].reshape(c, h * tw).astype(jnp.float32)
        xall = jnp.maximum(x2 * scale + shift, 0.0)[None]    # (1, C, H*TW)
    else:
        # Whole-block fused BN + ReLU: one lane-broadcast VPU op over (BN,C,L).
        x2 = x_ref[...].astype(jnp.float32)                  # (BN, C, H*TW)
        xall = jnp.maximum(x2 * scale[None] + shift[None], 0.0)

    for b in range(bn):                       # small static unroll (bn <= 8)
        xa = xall[b]                          # (C, H*TW)
        acc = None
        for kh in range(KH):                  # 5 taps, K=C matmuls, f32 accum
            tap = xa[:, kh * tw: kh * tw + ho * tw]          # aligned free view
            part = jnp.dot(w_ref[kh], tap,
                           preferred_element_type=jnp.float32)   # (OC, Ho*TW)
            acc = part if acc is None else acc + part
        if tiled:
            o_ref[b] = acc.reshape(oc, ho, tw).astype(o_ref.dtype)
        else:
            o_ref[b] = acc.astype(o_ref.dtype)               # lane-dense store


@jax.jit
def frame_feature_forward(x_nchw, conv_w, gamma, beta, run_mean, run_var,
                          eps=1e-5):
    """x_nchw: (N, C, H, W); conv_w: (OC, C, KH, 1)  (torch layouts, eval-mode BN)."""
    n, c, h, w = x_nchw.shape
    oc = conv_w.shape[0]
    ho = h - KH + 1

    # Fold BatchNorm (inference) into per-channel scale/shift, shaped (C, 1) so
    # the kernel applies them with a single lane-broadcast multiply-add.
    inv = 1.0 / jnp.sqrt(run_var.astype(jnp.float32) + eps)
    scale = gamma.astype(jnp.float32) * inv
    shift = beta.astype(jnp.float32) - run_mean.astype(jnp.float32) * scale
    scale2 = scale.reshape(c, 1)
    shift2 = shift.reshape(c, 1)

    # Torch conv weight (OC, C, KH, 1) -> (KH, OC, C): w_k[kh] is tap kh.
    w_k = jnp.transpose(conv_w[:, :, :, 0].astype(jnp.float32), (2, 0, 1))

    # Pad W up to a lane multiple so every tap / store inside the kernel is
    # 128-aligned.  Width-1 conv kernel => padding never touches valid outputs.
    wp = ((w + _LANE - 1) // _LANE) * _LANE
    if wp != w:
        x_nchw = jnp.pad(x_nchw, ((0, 0), (0, 0), (0, 0), (0, wp - w)))

    bn, tw, n_wt, tiled = _plan(n, c, oc, h, ho, wp, x_nchw.dtype.itemsize)
    # TODO(synk): for N == 1 with a single W tile, an H-tiled parallel axis
    # (4-row halo) would let both v7x TensorCores work; not needed at these
    # shapes (the batch/W axes already give >= 2 parallel steps).

    kernel = functools.partial(_frame_feature_kernel,
                               bn=bn, h=h, ho=ho, tw=tw, tiled=tiled)

    # Tiny parameter operands: full-array blocks with constant index maps.
    scale_spec = pl.BlockSpec((c, 1), lambda ni, wi: (0, 0))
    shift_spec = pl.BlockSpec((c, 1), lambda ni, wi: (0, 0))
    w_spec = pl.BlockSpec((KH, oc, c), lambda ni, wi: (0, 0, 0))

    if tiled:
        x_in = x_nchw                                                # (N,C,H,Wp)
        x_spec = pl.BlockSpec((bn, c, h, tw), lambda ni, wi: (ni, 0, 0, wi))
        out_shape = jax.ShapeDtypeStruct((n, oc, ho, wp), x_nchw.dtype)
        out_spec = pl.BlockSpec((bn, oc, ho, tw), lambda ni, wi: (ni, 0, 0, wi))
    else:
        x_in = x_nchw.reshape(n, c, h * wp)                          # metadata-only
        x_spec = pl.BlockSpec((bn, c, h * wp), lambda ni, wi: (ni, 0, 0))
        out_shape = jax.ShapeDtypeStruct((n, oc, ho * wp), x_nchw.dtype)
        out_spec = pl.BlockSpec((bn, oc, ho * wp), lambda ni, wi: (ni, 0, 0))

    itemsize = x_nchw.dtype.itemsize
    # Per-step footprint is bounded by the ~2 MiB step target (+ f32 temps);
    # size the scoped-VMEM limit from it (v7x: 64 MiB physical, 32 MiB default).
    step_bytes = bn * (c * h * tw + oc * ho * tw) * 4
    vmem_limit = int(min(48 * 2**20, max(16 * 2**20, 10 * step_bytes)))

    out = pl.pallas_call(
        kernel,
        out_shape=out_shape,
        grid=(n // bn, n_wt),
        in_specs=[scale_spec, shift_spec, x_spec, w_spec],
        out_specs=out_spec,
        compiler_params=pltpu.CompilerParams(
            dimension_semantics=("parallel", "parallel"),
            vmem_limit_bytes=vmem_limit),
        cost_estimate=pl.CostEstimate(
            flops=2 * n * oc * ho * wp * KH * c,
            transcendentals=0,
            bytes_accessed=((n * c * h * wp + n * oc * ho * wp) * itemsize
                            + (KH * oc * c + 2 * c) * 4)),
    )(scale2, shift2, x_in, w_k)

    if not tiled:
        out = out.reshape(n, oc, ho, wp)      # free trailing-dim split
    if wp != w:
        out = out[:, :, :, :w]                # drop the lane padding
    return out


def _reference_forward(x_nchw, conv_w, gamma, beta, run_mean, run_var,
                       eps=1e-5):
    """Plain-JAX reference reproducing the torch forward (eval-mode BN, ReLU)."""
    scale = gamma / jnp.sqrt(run_var + eps)
    shift = beta - run_mean * scale
    xn = x_nchw * scale[None, :, None, None] + shift[None, :, None, None]
    xa = jnp.maximum(xn, 0.0)
    out = lax.conv_general_dilated(
        xa.astype(jnp.float32), conv_w.astype(jnp.float32),
        window_strides=(1, 1), padding='VALID',
        dimension_numbers=('NCHW', 'OIHW', 'NCHW'))
    return out.astype(x_nchw.dtype)


if __name__ == "__main__":
    key = jax.random.PRNGKey(0)

    def make_case(k, n, in_c, out_c, h, w):
        kx, kw, kg, kb, km, kv = jax.random.split(k, 6)
        x = jax.random.normal(kx, (n, in_c, h, w), dtype=jnp.float32)
        conv_w = jax.random.normal(kw, (out_c, in_c, KH, 1), dtype=jnp.float32) * 0.1
        gamma = 1.0 + 0.1 * jax.random.normal(kg, (in_c,), dtype=jnp.float32)
        beta = 0.1 * jax.random.normal(kb, (in_c,), dtype=jnp.float32)
        run_mean = 0.1 * jax.random.normal(km, (in_c,), dtype=jnp.float32)
        run_var = jnp.abs(jax.random.normal(kv, (in_c,), dtype=jnp.float32)) + 0.5
        return x, conv_w, gamma, beta, run_mean, run_var

    k1, k2, k3 = jax.random.split(key, 3)

    # Case 1: module-scale shapes; W=16 -> padded to 128, flat lane-dense path.
    args1 = make_case(k1, 2, 4, 8, 16, 16)
    out1 = jax.block_until_ready(frame_feature_forward(*args1))
    ref1 = _reference_forward(*args1)
    assert out1.shape == (2, 8, 12, 16), out1.shape
    assert jnp.allclose(out1, ref1, atol=1e-4, rtol=1e-4), \
        float(jnp.max(jnp.abs(out1 - ref1)))

    # Case 2: W % 128 == 0 -> flat path with no padding, grid over the batch.
    args2 = make_case(k2, 2, 4, 8, 12, 256)
    out2 = jax.block_until_ready(frame_feature_forward(*args2))
    ref2 = _reference_forward(*args2)
    assert out2.shape == (2, 8, 8, 256), out2.shape
    assert jnp.allclose(out2, ref2, atol=1e-4, rtol=1e-4), \
        float(jnp.max(jnp.abs(out2 - ref2)))

    # Case 3: very wide rows -> exercises the 128-multiple W-tiled path
    # (~1 MiB per grid step, grid over W tiles).
    args3 = make_case(k3, 1, 4, 8, 16, 3584)
    out3 = jax.block_until_ready(frame_feature_forward(*args3))
    ref3 = _reference_forward(*args3)
    assert out3.shape == (1, 8, 12, 3584), out3.shape
    assert jnp.allclose(out3, ref3, atol=1e-4, rtol=1e-4), \
        float(jnp.max(jnp.abs(out3 - ref3)))

    print("KERNEL_OK")
</pallas_src>

<mosaic_0001>
module attributes {stable_mosaic.version = 11 : i64} {
  func.func @_frame_feature_kernel(%arg0: i32, %arg1: i32, %arg2: memref<4x1xf32, #tpu.memory_space<vmem>>, %arg3: memref<4x1xf32, #tpu.memory_space<vmem>>, %arg4: memref<1x4x2048xf32, #tpu.memory_space<vmem>>, %arg5: memref<5x8x4xf32, #tpu.memory_space<vmem>>, %arg6: memref<1x8x1536xf32, #tpu.memory_space<vmem>>) attributes {dimension_semantics = [#tpu.dimension_semantics<parallel>, #tpu.dimension_semantics<parallel>], iteration_bounds = array<i64: 2, 1>, scalar_prefetch = 0 : i64, scratch_operands = 0 : i64, tpu.core_type = #tpu.core_type<tc>, window_params = [{pipeline_mode = #tpu.pipeline_mode<synchronous>, transform_indices = @transform_0, window_bounds = array<i64: 4, 1>}, {pipeline_mode = #tpu.pipeline_mode<synchronous>, transform_indices = @transform_1, window_bounds = array<i64: 4, 1>}, {transform_indices = @transform_2, window_bounds = array<i64: 1, 4, 2048>}, {pipeline_mode = #tpu.pipeline_mode<synchronous>, transform_indices = @transform_3, window_bounds = array<i64: 5, 8, 4>}, {transform_indices = @transform_4, window_bounds = array<i64: 1, 8, 1536>}]} {
    %c0 = arith.constant 0 : index
    %c0_0 = arith.constant 0 : index
    %0 = vector.load %arg2[%c0, %c0_0] : memref<4x1xf32, #tpu.memory_space<vmem>>, vector<4x1xf32>
    %c0_1 = arith.constant 0 : index
    %c0_2 = arith.constant 0 : index
    %1 = vector.load %arg3[%c0_1, %c0_2] : memref<4x1xf32, #tpu.memory_space<vmem>>, vector<4x1xf32>
    %c0_3 = arith.constant 0 : index
    %c0_4 = arith.constant 0 : index
    %c0_5 = arith.constant 0 : index
    %2 = vector.load %arg4[%c0_3, %c0_4, %c0_5] : memref<1x4x2048xf32, #tpu.memory_space<vmem>>, vector<1x4x2048xf32>
    %3 = vector.shape_cast %0 : vector<4x1xf32> to vector<1x4x1xf32>
    %4 = vector.broadcast %3 : vector<1x4x1xf32> to vector<1x4x2048xf32>
    %5 = arith.mulf %2, %4 : vector<1x4x2048xf32>
    %6 = vector.shape_cast %1 : vector<4x1xf32> to vector<1x4x1xf32>
    %7 = vector.broadcast %6 : vector<1x4x1xf32> to vector<1x4x2048xf32>
    %8 = arith.addf %5, %7 : vector<1x4x2048xf32>
    %cst = arith.constant 0.000000e+00 : f32
    %9 = vector.broadcast %cst : f32 to vector<1x4x2048xf32>
    %10 = arith.maximumf %8, %9 : vector<1x4x2048xf32>
    %11 = vector.shape_cast %10 : vector<1x4x2048xf32> to vector<4x2048xf32>
    %12 = vector.extract_strided_slice %11 {offsets = [0, 0], sizes = [4, 1536], strides = [1, 1]} : vector<4x2048xf32> to vector<4x1536xf32>
    %c0_6 = arith.constant 0 : index
    %c0_7 = arith.constant 0 : index
    %c0_8 = arith.constant 0 : index
    %13 = vector.load %arg5[%c0_6, %c0_7, %c0_8] : memref<5x8x4xf32, #tpu.memory_space<vmem>>, vector<1x8x4xf32>
    %14 = vector.shape_cast %13 : vector<1x8x4xf32> to vector<8x4xf32>
    %cst_9 = arith.constant dense<0.000000e+00> : vector<8x1536xf32>
    %15 = tpu.matmul %14, %12, %cst_9 {dimension_numbers = #tpu.dot_dimension_numbers<[1], [0], [0], [1], [0, 0, 1, 1], [], []>} : vector<8x4xf32>, vector<4x1536xf32>, vector<8x1536xf32> -> vector<8x1536xf32>
    %16 = vector.extract_strided_slice %11 {offsets = [0, 128], sizes = [4, 1536], strides = [1, 1]} : vector<4x2048xf32> to vector<4x1536xf32>
    %c1 = arith.constant 1 : index
    %c0_10 = arith.constant 0 : index
    %c0_11 = arith.constant 0 : index
    %17 = vector.load %arg5[%c1, %c0_10, %c0_11] : memref<5x8x4xf32, #tpu.memory_space<vmem>>, vector<1x8x4xf32>
    %18 = vector.shape_cast %17 : vector<1x8x4xf32> to vector<8x4xf32>
    %cst_12 = arith.constant dense<0.000000e+00> : vector<8x1536xf32>
    %19 = tpu.matmul %18, %16, %cst_12 {dimension_numbers = #tpu.dot_dimension_numbers<[1], [0], [0], [1], [0, 0, 1, 1], [], []>} : vector<8x4xf32>, vector<4x1536xf32>, vector<8x1536xf32> -> vector<8x1536xf32>
    %20 = arith.addf %15, %19 : vector<8x1536xf32>
    %21 = vector.extract_strided_slice %11 {offsets = [0, 256], sizes = [4, 1536], strides = [1, 1]} : vector<4x2048xf32> to vector<4x1536xf32>
    %c2 = arith.constant 2 : index
    %c0_13 = arith.constant 0 : index
    %c0_14 = arith.constant 0 : index
    %22 = vector.load %arg5[%c2, %c0_13, %c0_14] : memref<5x8x4xf32, #tpu.memory_space<vmem>>, vector<1x8x4xf32>
    %23 = vector.shape_cast %22 : vector<1x8x4xf32> to vector<8x4xf32>
    %cst_15 = arith.constant dense<0.000000e+00> : vector<8x1536xf32>
    %24 = tpu.matmul %23, %21, %cst_15 {dimension_numbers = #tpu.dot_dimension_numbers<[1], [0], [0], [1], [0, 0, 1, 1], [], []>} : vector<8x4xf32>, vector<4x1536xf32>, vector<8x1536xf32> -> vector<8x1536xf32>
    %25 = arith.addf %20, %24 : vector<8x1536xf32>
    %26 = vector.extract_strided_slice %11 {offsets = [0, 384], sizes = [4, 1536], strides = [1, 1]} : vector<4x2048xf32> to vector<4x1536xf32>
    %c3 = arith.constant 3 : index
    %c0_16 = arith.constant 0 : index
    %c0_17 = arith.constant 0 : index
    %27 = vector.load %arg5[%c3, %c0_16, %c0_17] : memref<5x8x4xf32, #tpu.memory_space<vmem>>, vector<1x8x4xf32>
    %28 = vector.shape_cast %27 : vector<1x8x4xf32> to vector<8x4xf32>
    %cst_18 = arith.constant dense<0.000000e+00> : vector<8x1536xf32>
    %29 = tpu.matmul %28, %26, %cst_18 {dimension_numbers = #tpu.dot_dimension_numbers<[1], [0], [0], [1], [0, 0, 1, 1], [], []>} : vector<8x4xf32>, vector<4x1536xf32>, vector<8x1536xf32> -> vector<8x1536xf32>
    %30 = arith.addf %25, %29 : vector<8x1536xf32>
    %31 = vector.extract_strided_slice %11 {offsets = [0, 512], sizes = [4, 1536], strides = [1, 1]} : vector<4x2048xf32> to vector<4x1536xf32>
    %c4 = arith.constant 4 : index
    %c0_19 = arith.constant 0 : index
    %c0_20 = arith.constant 0 : index
    %32 = vector.load %arg5[%c4, %c0_19, %c0_20] : memref<5x8x4xf32, #tpu.memory_space<vmem>>, vector<1x8x4xf32>
    %33 = vector.shape_cast %32 : vector<1x8x4xf32> to vector<8x4xf32>
    %cst_21 = arith.constant dense<0.000000e+00> : vector<8x1536xf32>
    %34 = tpu.matmul %33, %31, %cst_21 {dimension_numbers = #tpu.dot_dimension_numbers<[1], [0], [0], [1], [0, 0, 1, 1], [], []>} : vector<8x4xf32>, vector<4x1536xf32>, vector<8x1536xf32> -> vector<8x1536xf32>
    %35 = arith.addf %30, %34 : vector<8x1536xf32>
    %c0_22 = arith.constant 0 : index
    %c0_23 = arith.constant 0 : index
    %c0_24 = arith.constant 0 : index
    %36 = vector.load %arg6[%c0_22, %c0_23, %c0_24] : memref<1x8x1536xf32, #tpu.memory_space<vmem>>, vector<1x8x1536xf32>
    %37 = vector.shape_cast %36 : vector<1x8x1536xf32> to vector<8x1536xf32>
    %38 = vector.shape_cast %35 : vector<8x1536xf32> to vector<1x8x1536xf32>
    tpu.vector_store %arg6[%c0_22, %c0_23, %c0_24], %38 {strides = array<i32>} : memref<1x8x1536xf32, #tpu.memory_space<vmem>>, vector<1x8x1536xf32>,
    return
  }
  func.func @transform_0(%arg0: i32, %arg1: i32) -> (i32, i32) {
    %c0_i32 = arith.constant 0 : i32
    %c0_i32_0 = arith.constant 0 : i32
    %c0_i32_1 = arith.constant 0 : i32
    return %c0_i32, %c0_i32_0 : i32, i32
  }
  func.func @transform_1(%arg0: i32, %arg1: i32) -> (i32, i32) {
    %c0_i32 = arith.constant 0 : i32
    %c0_i32_0 = arith.constant 0 : i32
    %c0_i32_1 = arith.constant 0 : i32
    return %c0_i32, %c0_i32_0 : i32, i32
  }
  func.func @transform_2(%arg0: i32, %arg1: i32) -> (i32, i32, i32) {
    %c0_i32 = arith.constant 0 : i32
    %c0_i32_0 = arith.constant 0 : i32
    %c0_i32_1 = arith.constant 0 : i32
    return %arg0, %c0_i32, %c0_i32_0 : i32, i32, i32
  }
  func.func @transform_3(%arg0: i32, %arg1: i32) -> (i32, i32, i32) {
    %c0_i32 = arith.constant 0 : i32
    %c0_i32_0 = arith.constant 0 : i32
    %c0_i32_1 = arith.constant 0 : i32
    %c0_i32_2 = arith.constant 0 : i32
    return %c0_i32, %c0_i32_0, %c0_i32_1 : i32, i32, i32
  }
  func.func @transform_4(%arg0: i32, %arg1: i32) -> (i32, i32, i32) {
    %c0_i32 = arith.constant 0 : i32
    %c0_i32_0 = arith.constant 0 : i32
    %c0_i32_1 = arith.constant 0 : i32
    return %arg0, %c0_i32, %c0_i32_0 : i32, i32, i32
  }
}

</mosaic_0001>

<llo_original>
// kernel: frame_feature_forward.1
$region0: #{frame_feature_forward.1}
  #allocation0 [shape = 'u32[]', space=smem, size = 0x4, offset = 0x4, fixed_abs, tag = 'smem constant byte address 0x4 - core index']
  #allocation1 [shape = 'u32[144,128]{1,0:T(1,128)}', space=vmem, size = 0x12000, scoped, tag = 'internal scratch']
  %s0 = inlined_call_operand.vmem [shape: f32[4,1], index: 0, kind: input, shape index: {}]
  %s1 = inlined_call_operand.vmem [shape: f32[4,1], index: 1, kind: input, shape index: {}]
  %s2 = inlined_call_operand.vmem [shape: f32[2,4,2048], index: 2, kind: input, shape index: {}]
  %s3 = inlined_call_operand.vmem [shape: f32[5,8,4], index: 3, kind: input, shape index: {}]
  %s4 = inlined_call_operand.hbm [shape: f32[2,8,1536], index: 4, kind: output, shape index: {}]
  %s5 = sld [smem:[#allocation0]]
  $region49: #{frame_feature_forward.1} parent=0
    _
  %s7 = ssub.s32 1, %s5
  %s8 = scalar_select 0, %s7, %s5
  $region1: #{frame_feature_forward.1} parent=0
    #allocation2 [shape = 'u8[98304]{0}', space=vmem, size = 0x18000, scoped, tag = 'output window, operand 0']
    #allocation3 [shape = 's32[2]{0}', space=sflag, size = 0x8, scoped, tag = 'scoped memory for frame_feature_forward.1']
    %9 = vsyncpa [#allocation3], 0
    %s10 = scalar_lea.sflag [#allocation3], 1
    %11 = vsyncpa %s10, 0
    loop: start=0, step=1, limit=4
    $region2: #{frame_feature_forward.1} parent=1 // loop_pre_header
      _
    $region3: #{frame_feature_forward.1} parent=1 // loop_header
      %s13 = sphi 0, %s17
      %p14 = scmp.ge.s32.totalorder %s13, 4
      %s20 = sphi 0, %s32
      %s21 = sphi 0, %s28
      %s22 = sphi 0, %s20
      %s23 = sphi 0, %s21
      %s24 = sphi 0, %s22
      %s25 = sphi 0, %s23
      %s33 = sphi 0, %s33
      %s35 = sphi 0, %s33
      %s36 = sphi 0, %s35
      %s50 = sphi 0, %s36
      %s54 = sphi 0, %s54
      %s56 = sphi 0, %s54
      %s57 = sphi 0, %s56
      %s71 = sphi 0, %s57
      %s77 = sphi 0, %s79
      %s80 = sphi 0, %s77
      %s81 = sphi 0, %s80
      %s97 = sphi 0, %s81
      %s101 = sphi 0, %s101
      %s103 = sphi 0, %s101
      %s104 = sphi 0, %s103
      %s118 = sphi 0, %s104
      %s124 = sphi 0, %s126
      %s127 = sphi 0, %s124
      %s128 = sphi 0, %s127
      %s144 = sphi 0, %s128
    $region4: #{frame_feature_forward.1} parent=1 // loop_header_branch
      %16 = sbr.rel (%p14) target = $region8
    $region5: #{frame_feature_forward.1} parent=1 // loop_body
      %s18 = ssub.s32 %s13, 1
      %s19 = ssub.s32 %s13, 2
      %s26 = sadd.s32 1, %s21
      %p27 = scmp.ge.s32.totalorder %s26, 1
      %s28 = scalar_select %p27, 0, %s26
      %s29 = sadd.s32 1, %s20
      %s30 = scalar_select %p27, %s29, %s20
      %p31 = scmp.ge.s32.totalorder %s30, 2
      %s32 = scalar_select %p31, 0, %s30
      %s34 = sadd.s32 %s33, 1
      %p37 = scmp.eq.s32.totalorder %s13, 1
      %p38 = scmp.ne.s32.totalorder %s33, %s35
      %p39 = scmp.eq.s32.totalorder %s13, 0
      %p40 = por %p38, %p39
      %p41 = scmp.ne.s32.totalorder %s33, %s35
      %p42 = scmp.eq.s32.totalorder %s18, 1
      %p43 = por %p41, %p42
      %p44 = scmp.ne.s32.totalorder %s35, %s36
      %p45 = scmp.eq.s32.totalorder %s18, 0
      %p46 = por %p44, %p45
      %p47 = scmp.ne.s32.totalorder %s35, %s36
      %p48 = scmp.eq.s32.totalorder %s19, 1
      %p49 = por %p47, %p48
      %p51 = scmp.ne.s32.totalorder %s36, %s50
      %p52 = scmp.eq.s32.totalorder %s19, 0
      %p53 = por %p51, %p52
      %s55 = sadd.s32 %s54, 1
      %p58 = scmp.eq.s32.totalorder %s13, 1
      %p59 = scmp.ne.s32.totalorder %s54, %s56
      %p60 = scmp.eq.s32.totalorder %s13, 0
      %p61 = por %p59, %p60
      %p62 = scmp.ne.s32.totalorder %s54, %s56
      %p63 = scmp.eq.s32.totalorder %s18, 1
      %p64 = por %p62, %p63
      %p65 = scmp.ne.s32.totalorder %s56, %s57
      %p66 = scmp.eq.s32.totalorder %s18, 0
      %p67 = por %p65, %p66
      %p68 = scmp.ne.s32.totalorder %s56, %s57
      %p69 = scmp.eq.s32.totalorder %s19, 1
      %p70 = por %p68, %p69
      %p72 = scmp.ne.s32.totalorder %s57, %s71
      %p73 = scmp.eq.s32.totalorder %s19, 0
      %p74 = por %p72, %p73
      %s75 = ssub.s32 %s20, %s32
      %p76 = scmp.eq.s32.totalorder %s75, 0
      %s78 = sadd.s32 %s77, 1
      %s79 = scalar_select %p76, %s77, %s78
      %p82 = pneg %p76
      %p83 = scmp.eq.s32.totalorder %s13, 1
      %p84 = por %p82, %p83
      %p85 = scmp.ne.s32.totalorder %s77, %s80
      %p86 = scmp.eq.s32.totalorder %s13, 0
      %p87 = por %p85, %p86
      %p88 = scmp.ne.s32.totalorder %s77, %s80
      %p89 = scmp.eq.s32.totalorder %s18, 1
      %p90 = por %p88, %p89
      %p91 = scmp.ne.s32.totalorder %s80, %s81
      %p92 = scmp.eq.s32.totalorder %s18, 0
      %p93 = por %p91, %p92
      %p94 = scmp.ne.s32.totalorder %s80, %s81
      %p95 = scmp.eq.s32.totalorder %s19, 1
      %p96 = por %p94, %p95
      %p98 = scmp.ne.s32.totalorder %s81, %s97
      %p99 = scmp.eq.s32.totalorder %s19, 0
      %p100 = por %p98, %p99
      %s102 = sadd.s32 %s101, 1
      %p105 = scmp.eq.s32.totalorder %s13, 1
      %p106 = scmp.ne.s32.totalorder %s101, %s103
      %p107 = scmp.eq.s32.totalorder %s13, 0
      %p108 = por %p106, %p107
      %p109 = scmp.ne.s32.totalorder %s101, %s103
      %p110 = scmp.eq.s32.totalorder %s18, 1
      %p111 = por %p109, %p110
      %p112 = scmp.ne.s32.totalorder %s103, %s104
      %p113 = scmp.eq.s32.totalorder %s18, 0
      %p114 = por %p112, %p113
      %p115 = scmp.ne.s32.totalorder %s103, %s104
      %p116 = scmp.eq.s32.totalorder %s19, 1
      %p117 = por %p115, %p116
      %p119 = scmp.ne.s32.totalorder %s104, %s118
      %p120 = scmp.eq.s32.totalorder %s19, 0
      %p121 = por %p119, %p120
      %s122 = ssub.s32 %s20, %s32
      %p123 = scmp.eq.s32.totalorder %s122, 0
      %s125 = sadd.s32 %s124, 1
      %s126 = scalar_select %p123, %s124, %s125
      %p129 = pneg %p123
      %p130 = scmp.eq.s32.totalorder %s13, 1
      %p131 = por %p129, %p130
      %p132 = scmp.ne.s32.totalorder %s124, %s127
      %p133 = scmp.eq.s32.totalorder %s13, 0
      %p134 = por %p132, %p133
      %p135 = scmp.ne.s32.totalorder %s124, %s127
      %p136 = scmp.eq.s32.totalorder %s18, 1
      %p137 = por %p135, %p136
      %p138 = scmp.ne.s32.totalorder %s127, %s128
      %p139 = scmp.eq.s32.totalorder %s18, 0
      %p140 = por %p138, %p139
      %p141 = scmp.ne.s32.totalorder %s127, %s128
      %p142 = scmp.eq.s32.totalorder %s19, 1
      %p143 = por %p141, %p142
      %p145 = scmp.ne.s32.totalorder %s128, %s144
      %p146 = scmp.eq.s32.totalorder %s19, 0
      %p147 = por %p145, %p146
      %p148 = scmp.le.s32.totalorder 1, %s13
      %p149 = scmp.lt.s32.totalorder %s13, 3
      %p150 = pnand %p148, %p149
      %p151 = pneg %p150
      // Predicated region
      $region9: #{frame_feature_forward.1} parent=5 // pred_check
        _
      $region10: #{frame_feature_forward.1} parent=5 // pred_check_branch
        %153 = sbr.rel (%p150) target = $region12
      $region11: #{frame_feature_forward.1} parent=5 // pred_region
        %s154 = ssub.s32 %s13, 1
        // Predicated region
        $region13: #{frame_feature_forward.1} parent=11 // pred_check
          %p155 = pneg %p46
        $region14: #{frame_feature_forward.1} parent=11 // pred_check_branch
          %157 = sbr.rel (%p155) target = $region16
        $region15: #{frame_feature_forward.1} parent=11 // pred_region
          _
        $region16: #{frame_feature_forward.1} parent=11 // pred_fallthru
          _
        // Predicated region
        $region17: #{frame_feature_forward.1} parent=11 // pred_check
          %p158 = pneg %p67
        $region18: #{frame_feature_forward.1} parent=11 // pred_check_branch
          %160 = sbr.rel (%p158) target = $region20
        $region19: #{frame_feature_forward.1} parent=11 // pred_region
          _
        $region20: #{frame_feature_forward.1} parent=11 // pred_fallthru
          _
        // Predicated region
        $region21: #{frame_feature_forward.1} parent=11 // pred_check
          %p161 = pneg %p114
        $region22: #{frame_feature_forward.1} parent=11 // pred_check_branch
          %163 = sbr.rel (%p161) target = $region24
        $region23: #{frame_feature_forward.1} parent=11 // pred_region
          _
        $region24: #{frame_feature_forward.1} parent=11 // pred_fallthru
          _
      $region12: #{frame_feature_forward.1} parent=5 // pred_fallthru
        _
      %p164 = scmp.lt.s32.totalorder %s13, 2
      // Predicated region
      $region25: #{frame_feature_forward.1} parent=5 // pred_check
        %p165 = pneg %p164
      $region26: #{frame_feature_forward.1} parent=5 // pred_check_branch
        %167 = sbr.rel (%p165) target = $region28
      $region27: #{frame_feature_forward.1} parent=5 // pred_region
        // Predicated region
        $region29: #{frame_feature_forward.1} parent=27 // pred_check
          %p168 = pneg %p87
        $region30: #{frame_feature_forward.1} parent=27 // pred_check_branch
          %170 = sbr.rel (%p168) target = $region32
        $region31: #{frame_feature_forward.1} parent=27 // pred_region
          %p171 = scmp.lt.s32.totalorder %s20, 1
          %s172 = scalar_select %p171, %s20, 1
          %s173 = smul.addr %s172, 16
          %s174 = smul.addr %s173, 4
          %s175 = scalar_lea.vmem %s2, %s174
        $region32: #{frame_feature_forward.1} parent=27 // pred_fallthru
          _
      $region28: #{frame_feature_forward.1} parent=5 // pred_fallthru
        _
      %p176 = scmp.le.s32.totalorder 1, %s13
      %p177 = scmp.lt.s32.totalorder %s13, 3
      %p178 = pnand %p176, %p177
      %p179 = pneg %p178
      // Predicated region
      $region33: #{frame_feature_forward.1} parent=5 // pred_check
        _
      $region34: #{frame_feature_forward.1} parent=5 // pred_check_branch
        %181 = sbr.rel (%p178) target = $region36
      $region35: #{frame_feature_forward.1} parent=5 // pred_region
        %s182 = ssub.s32 %s13, 1
        %p183 = pneg %p46
        %p184 = pneg %p43
        %p185 = pneg %p67
        %p186 = pneg %p64
        %p187 = scmp.lt.s32.totalorder %s22, 1
        %s188 = scalar_select %p187, %s22, 1
        %s189 = smul.addr %s188, 16
        %s190 = smul.addr %s189, 4
        %s191 = scalar_lea.vmem %s2, %s190
        %p192 = pneg %p93
        %p193 = pneg %p90
        %p194 = pneg %p114
        %p195 = pneg %p111
        %p196 = pneg %p140
        %p197 = pneg %p137
        %s198 = sand.u32 %s127, 1
        %s199 = scalar_lea.sflag [#allocation3], %s198
        %s200 = sand.u32 %s127, 1
        %s201 = smul.addr %s200, 96
        %s202 = scalar_lea.vmem [#allocation2], %s201
        %p203 = scmp.lt.s32.totalorder %s22, 1
        %s204 = scalar_select %p203, %s22, 1
        %s205 = smul.addr %s204, 16
        %s206 = smul.addr %s205, 4
        %s207 = scalar_lea.vmem %s2, %s206
        %v208 = vld [vmem:[%s0] sm:$0xf]
        %v209 = vld [vmem:[%s1] sm:$0xf]
        %v210 = vld [vmem:[%s207] sm:$0xff]
        %v211 = vld [vmem:[%s207 + $0x8] sm:$0xff]
        %v212 = vld [vmem:[%s207 + $0x10] sm:$0xff]
        %v213 = vld [vmem:[%s207 + $0x18] sm:$0xff]
        %v214 = vld [vmem:[%s207 + $0x20] sm:$0xff]
        %v215 = vld [vmem:[%s207 + $0x28] sm:$0xff]
        %v216 = vld [vmem:[%s207 + $0x30] sm:$0xff]
        %v217 = vld [vmem:[%s207 + $0x38] sm:$0xff]
        %219 = vset.pattern.permute.xlu0 0
        %220 = vperm.xlu0 %219, %v208
        %v221 = vpop.permute.xlu0 %220
        %v223 = vunpack.c.l.s4 839922192
        %v224 = vunpack.c.0.s8 %v223
        %v225 = vlaneseq
        %v226 = vshrl.u32 %v225, 7
        %v227 = vsub.s32 %v224, %v226
        %v228 = vrot.slane %v221, %v227
        %v230 = vmul.f32 %v210, %v228
        %v231 = vmul.f32 %v211, %v228
        %v232 = vmul.f32 %v212, %v228
        %v233 = vmul.f32 %v213, %v228
        %v234 = vmul.f32 %v214, %v228
        %v235 = vmul.f32 %v215, %v228
        %v236 = vmul.f32 %v216, %v228
        %v237 = vmul.f32 %v217, %v228
        %239 = vset.pattern.permute.xlu0 0
        %240 = vperm.xlu0 %239, %v209
        %v241 = vpop.permute.xlu0 %240
        %v243 = vunpack.c.l.s4 839922192
        %v244 = vunpack.c.0.s8 %v243
        %v245 = vlaneseq
        %v246 = vshrl.u32 %v245, 7
        %v247 = vsub.s32 %v244, %v246
        %v248 = vrot.slane %v241, %v247
        %v250 = vadd.f32 %v230, %v248
        %v251 = vadd.f32 %v231, %v248
        %v252 = vadd.f32 %v232, %v248
        %v253 = vadd.f32 %v233, %v248
        %v254 = vadd.f32 %v234, %v248
        %v255 = vadd.f32 %v235, %v248
        %v256 = vadd.f32 %v236, %v248
        %v257 = vadd.f32 %v237, %v248
        %v258 = vmax.f32 %v250, 0.0
        %v259 = vmax.f32 %v251, 0.0
        %v260 = vmax.f32 %v252, 0.0
        %v261 = vmax.f32 %v253, 0.0
        %v262 = vmax.f32 %v254, 0.0
        %v263 = vmax.f32 %v255, 0.0
        %v264 = vmax.f32 %v256, 0.0
        %v265 = vmax.f32 %v257, 0.0
        %v266 = vld [vmem:[%s3] sm:$0xff]
        %s267 = scalar_lea.vmem %s3, 8
        %v268 = vld [vmem:[%s267] sm:$0xff]
        %v276 = vcombine.high %v258, %v258
        %v277 = vcombine.high %v259, %v259
        %v278 = vcombine.high %v260, %v260
        %v279 = vcombine.high %v261, %v261
        %v280 = vcombine.high %v262, %v262
        %v281 = vcombine.high %v263, %v263
        %vm282 = vcmask 31744
        %v284 = vsel %vm282, %v268, 0
        %vm286 = vcmask 1043456
        %v287 = vsel %vm286, %v276, 0
        %v289 = vsel %vm286, %v259, 0
        %v291 = vsel %vm286, %v277, 0
        %v293 = vsel %vm286, %v260, 0
        %v295 = vsel %vm286, %v278, 0
        %v297 = vsel %vm286, %v261, 0
        %v299 = vsel %vm286, %v279, 0
        %v301 = vsel %vm286, %v262, 0
        %v303 = vsel %vm286, %v280, 0
        %v305 = vsel %vm286, %v263, 0
        %v307 = vsel %vm286, %v281, 0
        %v309 = vsel %vm286, %v264, 0
        %311 = vmatprep.subr.mxu0 %v289
        %312 = vmatpush1.msra.mxu0 %v287
        %313 = vmatprep.subr.mxu0 0.0
        %314 = vmatpush1.msra.mxu0 0.0
        %315 = vmatprep.subr.mxu0 0.0
        %316 = vmatpush1.msra.mxu0 0.0
        %317 = vmatprep.subr.mxu0 0.0
        %318 = vmatpush1.msra.mxu0 0.0
        %319 = vmatprep.subr.mxu0 0.0
        %320 = vmatpush1.msra.mxu0 0.0
        %321 = vmatprep.subr.mxu0 0.0
        %322 = vmatpush1.msra.mxu0 0.0
        %323 = vmatprep.subr.mxu0 0.0
        %324 = vmatpush1.msra.mxu0 0.0
        %325 = vmatprep.subr.mxu0 0.0
        %326 = vmatpush1.msra.mxu0 0.0
        %327 = vmatprep.subr.mxu0 0.0
        %328 = vmatpush1.msra.mxu0 0.0
        %329 = vmatprep.subr.mxu0 0.0
        %330 = vmatpush1.msra.mxu0 0.0
        %331 = vmatprep.subr.mxu0 0.0
        %332 = vmatpush1.msra.mxu0 0.0
        %333 = vmatprep.subr.mxu0 0.0
        %334 = vmatpush1.msra.mxu0 0.0
        %335 = vmatprep.subr.mxu0 0.0
        %336 = vmatpush1.msra.mxu0 0.0
        %337 = vmatprep.subr.mxu0 0.0
        %338 = vmatpush1.msra.mxu0 0.0
        %339 = vmatprep.subr.mxu0 0.0
        %340 = vmatpush1.msra.mxu0 0.0
        %341 = vmatprep.subr.mxu0 0.0
        %342 = vmatpush1.msra.mxu0 0.0
        %343 = vmatprep.subr.mxu0 0.0
        %344 = vmatpush1.msra.mxu0 0.0
        %345 = vmatprep.subr.mxu0 0.0
        %346 = vmatpush1.msra.mxu0 0.0
        %347 = vmatprep.subr.mxu0 0.0
        %348 = vmatpush1.msra.mxu0 0.0
        %349 = vmatprep.subr.mxu0 0.0
        %350 = vmatpush1.msra.mxu0 0.0
        %351 = vmatprep.subr.mxu0 0.0
        %352 = vmatpush1.msra.mxu0 0.0
        %353 = vmatprep.subr.mxu0 0.0
        %354 = vmatpush1.msra.mxu0 0.0
        %355 = vmatprep.subr.mxu0 0.0
        %356 = vmatpush1.msra.mxu0 0.0
        %357 = vmatprep.subr.mxu0 0.0
        %358 = vmatpush1.msra.mxu0 0.0
        %359 = vmatprep.subr.mxu0 0.0
        %360 = vmatpush1.msra.mxu0 0.0
        %361 = vmatprep.subr.mxu0 0.0
        %362 = vmatpush1.msra.mxu0 0.0
        %363 = vmatprep.subr.mxu0 0.0
        %364 = vmatpush1.msra.mxu0 0.0
        %365 = vmatprep.subr.mxu0 0.0
        %366 = vmatpush1.msra.mxu0 0.0
        %367 = vmatprep.subr.mxu0 0.0
        %368 = vmatpush1.msra.mxu0 0.0
        %369 = vmatprep.subr.mxu0 0.0
        %370 = vmatpush1.msra.mxu0 0.0
        %371 = vmatprep.subr.mxu0 0.0
        %372 = vmatpush1.msra.mxu0 0.0
        %373 = vmatprep.subr.mxu0 0.0
        %374 = vmatpush1.msra.mxu0 0.0
        %375 = vmatprep.mubr.f32.mxu0 0.0
        %376 = vmatmul.mubr.f32.gmra.mrb[0].mxu0 %v284
        %v377 = vpop.f32.mrb[0].mxu0
        %v378 = vadd.f32 0.0, %v377
        %v379 = vpop.f32.mrb[0].mxu0
        %v380 = vadd.f32 0.0, %v379
        %381 = vdwg.mxu0
        %382 = vmatprep.subr.mxu0 %v293
        %383 = vmatpush1.msra.mxu0 %v291
        %384 = vmatprep.subr.mxu0 0.0
        %385 = vmatpush1.msra.mxu0 0.0
        %386 = vmatprep.subr.mxu0 0.0
        %387 = vmatpush1.msra.mxu0 0.0
        %388 = vmatprep.subr.mxu0 0.0
        %389 = vmatpush1.msra.mxu0 0.0
        %390 = vmatprep.subr.mxu0 0.0
        %391 = vmatpush1.msra.mxu0 0.0
        %392 = vmatprep.subr.mxu0 0.0
        %393 = vmatpush1.msra.mxu0 0.0
        %394 = vmatprep.subr.mxu0 0.0
        %395 = vmatpush1.msra.mxu0 0.0
        %396 = vmatprep.subr.mxu0 0.0
        %397 = vmatpush1.msra.mxu0 0.0
        %398 = vmatprep.subr.mxu0 0.0
        %399 = vmatpush1.msra.mxu0 0.0
        %400 = vmatprep.subr.mxu0 0.0
        %401 = vmatpush1.msra.mxu0 0.0
        %402 = vmatprep.subr.mxu0 0.0
        %403 = vmatpush1.msra.mxu0 0.0
        %404 = vmatprep.subr.mxu0 0.0
        %405 = vmatpush1.msra.mxu0 0.0
        %406 = vmatprep.subr.mxu0 0.0
        %407 = vmatpush1.msra.mxu0 0.0
        %408 = vmatprep.subr.mxu0 0.0
        %409 = vmatpush1.msra.mxu0 0.0
        %410 = vmatprep.subr.mxu0 0.0
        %411 = vmatpush1.msra.mxu0 0.0
        %412 = vmatprep.subr.mxu0 0.0
        %413 = vmatpush1.msra.mxu0 0.0
        %414 = vmatprep.subr.mxu0 0.0
        %415 = vmatpush1.msra.mxu0 0.0
        %416 = vmatprep.subr.mxu0 0.0
        %417 = vmatpush1.msra.mxu0 0.0
        %418 = vmatprep.subr.mxu0 0.0
        %419 = vmatpush1.msra.mxu0 0.0
        %420 = vmatprep.subr.mxu0 0.0
        %421 = vmatpush1.msra.mxu0 0.0
        %422 = vmatprep.subr.mxu0 0.0
        %423 = vmatpush1.msra.mxu0 0.0
        %424 = vmatprep.subr.mxu0 0.0
        %425 = vmatpush1.msra.mxu0 0.0
        %426 = vmatprep.subr.mxu0 0.0
        %427 = vmatpush1.msra.mxu0 0.0
        %428 = vmatprep.subr.mxu0 0.0
        %429 = vmatpush1.msra.mxu0 0.0
        %430 = vmatprep.subr.mxu0 0.0
        %431 = vmatpush1.msra.mxu0 0.0
        %432 = vmatprep.subr.mxu0 0.0
        %433 = vmatpush1.msra.mxu0 0.0
        %434 = vmatprep.subr.mxu0 0.0
        %435 = vmatpush1.msra.mxu0 0.0
        %436 = vmatprep.subr.mxu0 0.0
        %437 = vmatpush1.msra.mxu0 0.0
        %438 = vmatprep.subr.mxu0 0.0
        %439 = vmatpush1.msra.mxu0 0.0
        %440 = vmatprep.subr.mxu0 0.0
        %441 = vmatpush1.msra.mxu0 0.0
        %442 = vmatprep.subr.mxu0 0.0
        %443 = vmatpush1.msra.mxu0 0.0
        %444 = vmatprep.subr.mxu0 0.0
        %445 = vmatpush1.msra.mxu0 0.0
        %446 = vmatprep.mubr.f32.mxu0 0.0
        %447 = vmatmul.mubr.f32.gmra.mrb[0].mxu0 %v284
        %v448 = vpop.f32.mrb[0].mxu0
        %v449 = vadd.f32 0.0, %v448
        %v450 = vpop.f32.mrb[0].mxu0
        %v451 = vadd.f32 0.0, %v450
        %452 = vdwg.mxu0
        %453 = vmatprep.subr.mxu0 %v297
        %454 = vmatpush1.msra.mxu0 %v295
        %455 = vmatprep.subr.mxu0 0.0
        %456 = vmatpush1.msra.mxu0 0.0
        %457 = vmatprep.subr.mxu0 0.0
        %458 = vmatpush1.msra.mxu0 0.0
        %459 = vmatprep.subr.mxu0 0.0
        %460 = vmatpush1.msra.mxu0 0.0
        %461 = vmatprep.subr.mxu0 0.0
        %462 = vmatpush1.msra.mxu0 0.0
        %463 = vmatprep.subr.mxu0 0.0
        %464 = vmatpush1.msra.mxu0 0.0
        %465 = vmatprep.subr.mxu0 0.0
        %466 = vmatpush1.msra.mxu0 0.0
        %467 = vmatprep.subr.mxu0 0.0
        %468 = vmatpush1.msra.mxu0 0.0
        %469 = vmatprep.subr.mxu0 0.0
        %470 = vmatpush1.msra.mxu0 0.0
        %471 = vmatprep.subr.mxu0 0.0
        %472 = vmatpush1.msra.mxu0 0.0
        %473 = vmatprep.subr.mxu0 0.0
        %474 = vmatpush1.msra.mxu0 0.0
        %475 = vmatprep.subr.mxu0 0.0
        %476 = vmatpush1.msra.mxu0 0.0
        %477 = vmatprep.subr.mxu0 0.0
        %478 = vmatpush1.msra.mxu0 0.0
        %479 = vmatprep.subr.mxu0 0.0
        %480 = vmatpush1.msra.mxu0 0.0
        %481 = vmatprep.subr.mxu0 0.0
        %482 = vmatpush1.msra.mxu0 0.0
        %483 = vmatprep.subr.mxu0 0.0
        %484 = vmatpush1.msra.mxu0 0.0
        %485 = vmatprep.subr.mxu0 0.0
        %486 = vmatpush1.msra.mxu0 0.0
        %487 = vmatprep.subr.mxu0 0.0
        %488 = vmatpush1.msra.mxu0 0.0
        %489 = vmatprep.subr.mxu0 0.0
        %490 = vmatpush1.msra.mxu0 0.0
        %491 = vmatprep.subr.mxu0 0.0
        %492 = vmatpush1.msra.mxu0 0.0
        %493 = vmatprep.subr.mxu0 0.0
        %494 = vmatpush1.msra.mxu0 0.0
        %495 = vmatprep.subr.mxu0 0.0
        %496 = vmatpush1.msra.mxu0 0.0
        %497 = vmatprep.subr.mxu0 0.0
        %498 = vmatpush1.msra.mxu0 0.0
        %499 = vmatprep.subr.mxu0 0.0
        %500 = vmatpush1.msra.mxu0 0.0
        %501 = vmatprep.subr.mxu0 0.0
        %502 = vmatpush1.msra.mxu0 0.0
        %503 = vmatprep.subr.mxu0 0.0
        %504 = vmatpush1.msra.mxu0 0.0
        %505 = vmatprep.subr.mxu0 0.0
        %506 = vmatpush1.msra.mxu0 0.0
        %507 = vmatprep.subr.mxu0 0.0
        %508 = vmatpush1.msra.mxu0 0.0
        %509 = vmatprep.subr.mxu0 0.0
        %510 = vmatpush1.msra.mxu0 0.0
        %511 = vmatprep.subr.mxu0 0.0
        %512 = vmatpush1.msra.mxu0 0.0
        %513 = vmatprep.subr.mxu0 0.0
        %514 = vmatpush1.msra.mxu0 0.0
        %515 = vmatprep.subr.mxu0 0.0
        %516 = vmatpush1.msra.mxu0 0.0
        %517 = vmatprep.mubr.f32.mxu0 0.0
        %518 = vmatmul.mubr.f32.gmra.mrb[0].mxu0 %v284
        %v519 = vpop.f32.mrb[0].mxu0
        %v520 = vadd.f32 0.0, %v519
        %v521 = vpop.f32.mrb[0].mxu0
        %v522 = vadd.f32 0.0, %v521
        %523 = vdwg.mxu0
        %524 = vmatprep.subr.mxu0 %v301
        %525 = vmatpush1.msra.mxu0 %v299
        %526 = vmatprep.subr.mxu0 0.0
        %527 = vmatpush1.msra.mxu0 0.0
        %528 = vmatprep.subr.mxu0 0.0
        %529 = vmatpush1.msra.mxu0 0.0
        %530 = vmatprep.subr.mxu0 0.0
        %531 = vmatpush1.msra.mxu0 0.0
        %532 = vmatprep.subr.mxu0 0.0
        %533 = vmatpush1.msra.mxu0 0.0
        %534 = vmatprep.subr.mxu0 0.0
        %535 = vmatpush1.msra.mxu0 0.0
        %536 = vmatprep.subr.mxu0 0.0
        %537 = vmatpush1.msra.mxu0 0.0
        %538 = vmatprep.subr.mxu0 0.0
        %539 = vmatpush1.msra.mxu0 0.0
        %540 = vmatprep.subr.mxu0 0.0
        %541 = vmatpush1.msra.mxu0 0.0
        %542 = vmatprep.subr.mxu0 0.0
        %543 = vmatpush1.msra.mxu0 0.0
        %544 = vmatprep.subr.mxu0 0.0
        %545 = vmatpush1.msra.mxu0 0.0
        %546 = vmatprep.subr.mxu0 0.0
        %547 = vmatpush1.msra.mxu0 0.0
        %548 = vmatprep.subr.mxu0 0.0
        %549 = vmatpush1.msra.mxu0 0.0
        %550 = vmatprep.subr.mxu0 0.0
        %551 = vmatpush1.msra.mxu0 0.0
        %552 = vmatprep.subr.mxu0 0.0
        %553 = vmatpush1.msra.mxu0 0.0
        %554 = vmatprep.subr.mxu0 0.0
        %555 = vmatpush1.msra.mxu0 0.0
        %556 = vmatprep.subr.mxu0 0.0
        %557 = vmatpush1.msra.mxu0 0.0
        %558 = vmatprep.subr.mxu0 0.0
        %559 = vmatpush1.msra.mxu0 0.0
        %560 = vmatprep.subr.mxu0 0.0
        %561 = vmatpush1.msra.mxu0 0.0
        %562 = vmatprep.subr.mxu0 0.0
        %563 = vmatpush1.msra.mxu0 0.0
        %564 = vmatprep.subr.mxu0 0.0
        %565 = vmatpush1.msra.mxu0 0.0
        %566 = vmatprep.subr.mxu0 0.0
        %567 = vmatpush1.msra.mxu0 0.0
        %568 = vmatprep.subr.mxu0 0.0
        %569 = vmatpush1.msra.mxu0 0.0
        %570 = vmatprep.subr.mxu0 0.0
        %571 = vmatpush1.msra.mxu0 0.0
        %572 = vmatprep.subr.mxu0 0.0
        %573 = vmatpush1.msra.mxu0 0.0
        %574 = vmatprep.subr.mxu0 0.0
        %575 = vmatpush1.msra.mxu0 0.0
        %576 = vmatprep.subr.mxu0 0.0
        %577 = vmatpush1.msra.mxu0 0.0
        %578 = vmatprep.subr.mxu0 0.0
        %579 = vmatpush1.msra.mxu0 0.0
        %580 = vmatprep.subr.mxu0 0.0
        %581 = vmatpush1.msra.mxu0 0.0
        %582 = vmatprep.subr.mxu0 0.0
        %583 = vmatpush1.msra.mxu0 0.0
        %584 = vmatprep.subr.mxu0 0.0
        %585 = vmatpush1.msra.mxu0 0.0
        %586 = vmatprep.subr.mxu0 0.0
        %587 = vmatpush1.msra.mxu0 0.0
        %588 = vmatprep.mubr.f32.mxu0 0.0
        %589 = vmatmul.mubr.f32.gmra.mrb[0].mxu0 %v284
        %v590 = vpop.f32.mrb[0].mxu0
        %v591 = vadd.f32 0.0, %v590
        %v592 = vpop.f32.mrb[0].mxu0
        %v593 = vadd.f32 0.0, %v592
        %594 = vdwg.mxu0
        %595 = vmatprep.subr.mxu0 %v305
        %596 = vmatpush1.msra.mxu0 %v303
        %597 = vmatprep.subr.mxu0 0.0
        %598 = vmatpush1.msra.mxu0 0.0
        %599 = vmatprep.subr.mxu0 0.0
        %600 = vmatpush1.msra.mxu0 0.0
        %601 = vmatprep.subr.mxu0 0.0
        %602 = vmatpush1.msra.mxu0 0.0
        %603 = vmatprep.subr.mxu0 0.0
        %604 = vmatpush1.msra.mxu0 0.0
        %605 = vmatprep.subr.mxu0 0.0
        %606 = vmatpush1.msra.mxu0 0.0
        %607 = vmatprep.subr.mxu0 0.0
        %608 = vmatpush1.msra.mxu0 0.0
        %609 = vmatprep.subr.mxu0 0.0
        %610 = vmatpush1.msra.mxu0 0.0
        %611 = vmatprep.subr.mxu0 0.0
        %612 = vmatpush1.msra.mxu0 0.0
        %613 = vmatprep.subr.mxu0 0.0
        %614 = vmatpush1.msra.mxu0 0.0
        %615 = vmatprep.subr.mxu0 0.0
        %616 = vmatpush1.msra.mxu0 0.0
        %617 = vmatprep.subr.mxu0 0.0
        %618 = vmatpush1.msra.mxu0 0.0
        %619 = vmatprep.subr.mxu0 0.0
        %620 = vmatpush1.msra.mxu0 0.0
        %621 = vmatprep.subr.mxu0 0.0
        %622 = vmatpush1.msra.mxu0 0.0
        %623 = vmatprep.subr.mxu0 0.0
        %624 = vmatpush1.msra.mxu0 0.0
        %625 = vmatprep.subr.mxu0 0.0
        %626 = vmatpush1.msra.mxu0 0.0
        %627 = vmatprep.subr.mxu0 0.0
        %628 = vmatpush1.msra.mxu0 0.0
        %629 = vmatprep.subr.mxu0 0.0
        %630 = vmatpush1.msra.mxu0 0.0
        %631 = vmatprep.subr.mxu0 0.0
        %632 = vmatpush1.msra.mxu0 0.0
        %633 = vmatprep.subr.mxu0 0.0
        %634 = vmatpush1.msra.mxu0 0.0
        %635 = vmatprep.subr.mxu0 0.0
        %636 = vmatpush1.msra.mxu0 0.0
        %637 = vmatprep.subr.mxu0 0.0
        %638 = vmatpush1.msra.mxu0 0.0
        %639 = vmatprep.subr.mxu0 0.0
        %640 = vmatpush1.msra.mxu0 0.0
        %641 = vmatprep.subr.mxu0 0.0
        %642 = vmatpush1.msra.mxu0 0.0
        %643 = vmatprep.subr.mxu0 0.0
        %644 = vmatpush1.msra.mxu0 0.0
        %645 = vmatprep.subr.mxu0 0.0
        %646 = vmatpush1.msra.mxu0 0.0
        %647 = vmatprep.subr.mxu0 0.0
        %648 = vmatpush1.msra.mxu0 0.0
        %649 = vmatprep.subr.mxu0 0.0
        %650 = vmatpush1.msra.mxu0 0.0
        %651 = vmatprep.subr.mxu0 0.0
        %652 = vmatpush1.msra.mxu0 0.0
        %653 = vmatprep.subr.mxu0 0.0
        %654 = vmatpush1.msra.mxu0 0.0
        %655 = vmatprep.subr.mxu0 0.0
        %656 = vmatpush1.msra.mxu0 0.0
        %657 = vmatprep.subr.mxu0 0.0
        %658 = vmatpush1.msra.mxu0 0.0
        %659 = vmatprep.mubr.f32.mxu0 0.0
        %660 = vmatmul.mubr.f32.gmra.mrb[0].mxu0 %v284
        %v661 = vpop.f32.mrb[0].mxu0
        %v662 = vadd.f32 0.0, %v661
        %v663 = vpop.f32.mrb[0].mxu0
        %v664 = vadd.f32 0.0, %v663
        %665 = vdwg.mxu0
        %666 = vmatprep.subr.mxu0 %v309
        %667 = vmatpush1.msra.mxu0 %v307
        %668 = vmatprep.subr.mxu0 0.0
        %669 = vmatpush1.msra.mxu0 0.0
        %670 = vmatprep.subr.mxu0 0.0
        %671 = vmatpush1.msra.mxu0 0.0
        %672 = vmatprep.subr.mxu0 0.0
        %673 = vmatpush1.msra.mxu0 0.0
        %674 = vmatprep.subr.mxu0 0.0
        %675 = vmatpush1.msra.mxu0 0.0
        %676 = vmatprep.subr.mxu0 0.0
        %677 = vmatpush1.msra.mxu0 0.0
        %678 = vmatprep.subr.mxu0 0.0
        %679 = vmatpush1.msra.mxu0 0.0
        %680 = vmatprep.subr.mxu0 0.0
        %681 = vmatpush1.msra.mxu0 0.0
        %682 = vmatprep.subr.mxu0 0.0
        %683 = vmatpush1.msra.mxu0 0.0
        %684 = vmatprep.subr.mxu0 0.0
        %685 = vmatpush1.msra.mxu0 0.0
        %686 = vmatprep.subr.mxu0 0.0
        %687 = vmatpush1.msra.mxu0 0.0
        %688 = vmatprep.subr.mxu0 0.0
        %689 = vmatpush1.msra.mxu0 0.0
        %690 = vmatprep.subr.mxu0 0.0
        %691 = vmatpush1.msra.mxu0 0.0
        %692 = vmatprep.subr.mxu0 0.0
        %693 = vmatpush1.msra.mxu0 0.0
        %694 = vmatprep.subr.mxu0 0.0
        %695 = vmatpush1.msra.mxu0 0.0
        %696 = vmatprep.subr.mxu0 0.0
        %697 = vmatpush1.msra.mxu0 0.0
        %698 = vmatprep.subr.mxu0 0.0
        %699 = vmatpush1.msra.mxu0 0.0
        %700 = vmatprep.subr.mxu0 0.0
        %701 = vmatpush1.msra.mxu0 0.0
        %702 = vmatprep.subr.mxu0 0.0
        %703 = vmatpush1.msra.mxu0 0.0
        %704 = vmatprep.subr.mxu0 0.0
        %705 = vmatpush1.msra.mxu0 0.0
        %706 = vmatprep.subr.mxu0 0.0
        %707 = vmatpush1.msra.mxu0 0.0
        %708 = vmatprep.subr.mxu0 0.0
        %709 = vmatpush1.msra.mxu0 0.0
        %710 = vmatprep.subr.mxu0 0.0
        %711 = vmatpush1.msra.mxu0 0.0
        %712 = vmatprep.subr.mxu0 0.0
        %713 = vmatpush1.msra.mxu0 0.0
        %714 = vmatprep.subr.mxu0 0.0
        %715 = vmatpush1.msra.mxu0 0.0
        %716 = vmatprep.subr.mxu0 0.0
        %717 = vmatpush1.msra.mxu0 0.0
        %718 = vmatprep.subr.mxu0 0.0
        %719 = vmatpush1.msra.mxu0 0.0
        %720 = vmatprep.subr.mxu0 0.0
        %721 = vmatpush1.msra.mxu0 0.0
        %722 = vmatprep.subr.mxu0 0.0
        %723 = vmatpush1.msra.mxu0 0.0
        %724 = vmatprep.subr.mxu0 0.0
        %725 = vmatpush1.msra.mxu0 0.0
        %726 = vmatprep.subr.mxu0 0.0
        %727 = vmatpush1.msra.mxu0 0.0
        %728 = vmatprep.subr.mxu0 0.0
        %729 = vmatpush1.msra.mxu0 0.0
        %730 = vmatprep.mubr.f32.mxu0 0.0
        %731 = vmatmul.mubr.f32.gmra.mrb[0].mxu0 %v284
        %v732 = vpop.f32.mrb[0].mxu0
        %v733 = vadd.f32 0.0, %v732
        %v734 = vpop.f32.mrb[0].mxu0
        %v735 = vadd.f32 0.0, %v734
        %736 = vdwg.mxu0
        %v738 = vsel %vm282, %v266, 0
        %v740 = vsel %vm286, %v258, 0
        %742 = vmatprep.subr.mxu0 %v287
        %743 = vmatpush1.msra.mxu0 %v740
        %744 = vmatprep.subr.mxu0 0.0
        %745 = vmatpush1.msra.mxu0 0.0
        %746 = vmatprep.subr.mxu0 0.0
        %747 = vmatpush1.msra.mxu0 0.0
        %748 = vmatprep.subr.mxu0 0.0
        %749 = vmatpush1.msra.mxu0 0.0
        %750 = vmatprep.subr.mxu0 0.0
        %751 = vmatpush1.msra.mxu0 0.0
        %752 = vmatprep.subr.mxu0 0.0
        %753 = vmatpush1.msra.mxu0 0.0
        %754 = vmatprep.subr.mxu0 0.0
        %755 = vmatpush1.msra.mxu0 0.0
        %756 = vmatprep.subr.mxu0 0.0
        %757 = vmatpush1.msra.mxu0 0.0
        %758 = vmatprep.subr.mxu0 0.0
        %759 = vmatpush1.msra.mxu0 0.0
        %760 = vmatprep.subr.mxu0 0.0
        %761 = vmatpush1.msra.mxu0 0.0
        %762 = vmatprep.subr.mxu0 0.0
        %763 = vmatpush1.msra.mxu0 0.0
        %764 = vmatprep.subr.mxu0 0.0
        %765 = vmatpush1.msra.mxu0 0.0
        %766 = vmatprep.subr.mxu0 0.0
        %767 = vmatpush1.msra.mxu0 0.0
        %768 = vmatprep.subr.mxu0 0.0
        %769 = vmatpush1.msra.mxu0 0.0
        %770 = vmatprep.subr.mxu0 0.0
        %771 = vmatpush1.msra.mxu0 0.0
        %772 = vmatprep.subr.mxu0 0.0
        %773 = vmatpush1.msra.mxu0 0.0
        %774 = vmatprep.subr.mxu0 0.0
        %775 = vmatpush1.msra.mxu0 0.0
        %776 = vmatprep.subr.mxu0 0.0
        %777 = vmatpush1.msra.mxu0 0.0
        %778 = vmatprep.subr.mxu0 0.0
        %779 = vmatpush1.msra.mxu0 0.0
        %780 = vmatprep.subr.mxu0 0.0
        %781 = vmatpush1.msra.mxu0 0.0
        %782 = vmatprep.subr.mxu0 0.0
        %783 = vmatpush1.msra.mxu0 0.0
        %784 = vmatprep.subr.mxu0 0.0
        %785 = vmatpush1.msra.mxu0 0.0
        %786 = vmatprep.subr.mxu0 0.0
        %787 = vmatpush1.msra.mxu0 0.0
        %788 = vmatprep.subr.mxu0 0.0
        %789 = vmatpush1.msra.mxu0 0.0
        %790 = vmatprep.subr.mxu0 0.0
        %791 = vmatpush1.msra.mxu0 0.0
        %792 = vmatprep.subr.mxu0 0.0
        %793 = vmatpush1.msra.mxu0 0.0
        %794 = vmatprep.subr.mxu0 0.0
        %795 = vmatpush1.msra.mxu0 0.0
        %796 = vmatprep.subr.mxu0 0.0
        %797 = vmatpush1.msra.mxu0 0.0
        %798 = vmatprep.subr.mxu0 0.0
        %799 = vmatpush1.msra.mxu0 0.0
        %800 = vmatprep.subr.mxu0 0.0
        %801 = vmatpush1.msra.mxu0 0.0
        %802 = vmatprep.subr.mxu0 0.0
        %803 = vmatpush1.msra.mxu0 0.0
        %804 = vmatprep.subr.mxu0 0.0
        %805 = vmatpush1.msra.mxu0 0.0
        %806 = vmatprep.mubr.f32.mxu0 0.0
        %807 = vmatmul.mubr.f32.gmra.mrb[0].mxu0 %v738
        %v808 = vpop.f32.mrb[0].mxu0
        %v809 = vadd.f32 %v378, %v808
        %v810 = vpop.f32.mrb[0].mxu0
        %v811 = vadd.f32 %v380, %v810
        %812 = vdwg.mxu0
        %813 = vmatprep.subr.mxu0 %v291
        %814 = vmatpush1.msra.mxu0 %v289
        %815 = vmatprep.subr.mxu0 0.0
        %816 = vmatpush1.msra.mxu0 0.0
        %817 = vmatprep.subr.mxu0 0.0
        %818 = vmatpush1.msra.mxu0 0.0
        %819 = vmatprep.subr.mxu0 0.0
        %820 = vmatpush1.msra.mxu0 0.0
        %821 = vmatprep.subr.mxu0 0.0
        %822 = vmatpush1.msra.mxu0 0.0
        %823 = vmatprep.subr.mxu0 0.0
        %824 = vmatpush1.msra.mxu0 0.0
        %825 = vmatprep.subr.mxu0 0.0
        %826 = vmatpush1.msra.mxu0 0.0
        %827 = vmatprep.subr.mxu0 0.0
        %828 = vmatpush1.msra.mxu0 0.0
        %829 = vmatprep.subr.mxu0 0.0
        %830 = vmatpush1.msra.mxu0 0.0
        %831 = vmatprep.subr.mxu0 0.0
        %832 = vmatpush1.msra.mxu0 0.0
        %833 = vmatprep.subr.mxu0 0.0
        %834 = vmatpush1.msra.mxu0 0.0
        %835 = vmatprep.subr.mxu0 0.0
        %836 = vmatpush1.msra.mxu0 0.0
        %837 = vmatprep.subr.mxu0 0.0
        %838 = vmatpush1.msra.mxu0 0.0
        %839 = vmatprep.subr.mxu0 0.0
        %840 = vmatpush1.msra.mxu0 0.0
        %841 = vmatprep.subr.mxu0 0.0
        %842 = vmatpush1.msra.mxu0 0.0
        %843 = vmatprep.subr.mxu0 0.0
        %844 = vmatpush1.msra.mxu0 0.0
        %845 = vmatprep.subr.mxu0 0.0
        %846 = vmatpush1.msra.mxu0 0.0
        %847 = vmatprep.subr.mxu0 0.0
        %848 = vmatpush1.msra.mxu0 0.0
        %849 = vmatprep.subr.mxu0 0.0
        %850 = vmatpush1.msra.mxu0 0.0
        %851 = vmatprep.subr.mxu0 0.0
        %852 = vmatpush1.msra.mxu0 0.0
        %853 = vmatprep.subr.mxu0 0.0
        %854 = vmatpush1.msra.mxu0 0.0
        %855 = vmatprep.subr.mxu0 0.0
        %856 = vmatpush1.msra.mxu0 0.0
        %857 = vmatprep.subr.mxu0 0.0
        %858 = vmatpush1.msra.mxu0 0.0
        %859 = vmatprep.subr.mxu0 0.0
        %860 = vmatpush1.msra.mxu0 0.0
        %861 = vmatprep.subr.mxu0 0.0
        %862 = vmatpush1.msra.mxu0 0.0
        %863 = vmatprep.subr.mxu0 0.0
        %864 = vmatpush1.msra.mxu0 0.0
        %865 = vmatprep.subr.mxu0 0.0
        %866 = vmatpush1.msra.mxu0 0.0
        %867 = vmatprep.subr.mxu0 0.0
        %868 = vmatpush1.msra.mxu0 0.0
        %869 = vmatprep.subr.mxu0 0.0
        %870 = vmatpush1.msra.mxu0 0.0
        %871 = vmatprep.subr.mxu0 0.0
        %872 = vmatpush1.msra.mxu0 0.0
        %873 = vmatprep.subr.mxu0 0.0
        %874 = vmatpush1.msra.mxu0 0.0
        %875 = vmatprep.subr.mxu0 0.0
        %876 = vmatpush1.msra.mxu0 0.0
        %877 = vmatprep.mubr.f32.mxu0 0.0
        %878 = vmatmul.mubr.f32.gmra.mrb[0].mxu0 %v738
        %v879 = vpop.f32.mrb[0].mxu0
        %v880 = vadd.f32 %v449, %v879
        %v881 = vpop.f32.mrb[0].mxu0
        %v882 = vadd.f32 %v451, %v881
        %883 = vdwg.mxu0
        %884 = vmatprep.subr.mxu0 %v295
        %885 = vmatpush1.msra.mxu0 %v293
        %886 = vmatprep.subr.mxu0 0.0
        %887 = vmatpush1.msra.mxu0 0.0
        %888 = vmatprep.subr.mxu0 0.0
        %889 = vmatpush1.msra.mxu0 0.0
        %890 = vmatprep.subr.mxu0 0.0
        %891 = vmatpush1.msra.mxu0 0.0
        %892 = vmatprep.subr.mxu0 0.0
        %893 = vmatpush1.msra.mxu0 0.0
        %894 = vmatprep.subr.mxu0 0.0
        %895 = vmatpush1.msra.mxu0 0.0
        %896 = vmatprep.subr.mxu0 0.0
        %897 = vmatpush1.msra.mxu0 0.0
        %898 = vmatprep.subr.mxu0 0.0
        %899 = vmatpush1.msra.mxu0 0.0
        %900 = vmatprep.subr.mxu0 0.0
        %901 = vmatpush1.msra.mxu0 0.0
        %902 = vmatprep.subr.mxu0 0.0
        %903 = vmatpush1.msra.mxu0 0.0
        %904 = vmatprep.subr.mxu0 0.0
        %905 = vmatpush1.msra.mxu0 0.0
        %906 = vmatprep.subr.mxu0 0.0
        %907 = vmatpush1.msra.mxu0 0.0
        %908 = vmatprep.subr.mxu0 0.0
        %909 = vmatpush1.msra.mxu0 0.0
        %910 = vmatprep.subr.mxu0 0.0
        %911 = vmatpush1.msra.mxu0 0.0
        %912 = vmatprep.subr.mxu0 0.0
        %913 = vmatpush1.msra.mxu0 0.0
        %914 = vmatprep.subr.mxu0 0.0
        %915 = vmatpush1.msra.mxu0 0.0
        %916 = vmatprep.subr.mxu0 0.0
        %917 = vmatpush1.msra.mxu0 0.0
        %918 = vmatprep.subr.mxu0 0.0
        %919 = vmatpush1.msra.mxu0 0.0
        %920 = vmatprep.subr.mxu0 0.0
        %921 = vmatpush1.msra.mxu0 0.0
        %922 = vmatprep.subr.mxu0 0.0
        %923 = vmatpush1.msra.mxu0 0.0
        %924 = vmatprep.subr.mxu0 0.0
        %925 = vmatpush1.msra.mxu0 0.0
        %926 = vmatprep.subr.mxu0 0.0
        %927 = vmatpush1.msra.mxu0 0.0
        %928 = vmatprep.subr.mxu0 0.0
        %929 = vmatpush1.msra.mxu0 0.0
        %930 = vmatprep.subr.mxu0 0.0
        %931 = vmatpush1.msra.mxu0 0.0
        %932 = vmatprep.subr.mxu0 0.0
        %933 = vmatpush1.msra.mxu0 0.0
        %934 = vmatprep.subr.mxu0 0.0
        %935 = vmatpush1.msra.mxu0 0.0
        %936 = vmatprep.subr.mxu0 0.0
        %937 = vmatpush1.msra.mxu0 0.0
        %938 = vmatprep.subr.mxu0 0.0
        %939 = vmatpush1.msra.mxu0 0.0
        %940 = vmatprep.subr.mxu0 0.0
        %941 = vmatpush1.msra.mxu0 0.0
        %942 = vmatprep.subr.mxu0 0.0
        %943 = vmatpush1.msra.mxu0 0.0
        %944 = vmatprep.subr.mxu0 0.0
        %945 = vmatpush1.msra.mxu0 0.0
        %946 = vmatprep.subr.mxu0 0.0
        %947 = vmatpush1.msra.mxu0 0.0
        %948 = vmatprep.mubr.f32.mxu0 0.0
        %949 = vmatmul.mubr.f32.gmra.mrb[0].mxu0 %v738
        %v950 = vpop.f32.mrb[0].mxu0
        %v951 = vadd.f32 %v520, %v950
        %v952 = vpop.f32.mrb[0].mxu0
        %v953 = vadd.f32 %v522, %v952
        %954 = vdwg.mxu0
        %955 = vmatprep.subr.mxu0 %v299
        %956 = vmatpush1.msra.mxu0 %v297
        %957 = vmatprep.subr.mxu0 0.0
        %958 = vmatpush1.msra.mxu0 0.0
        %959 = vmatprep.subr.mxu0 0.0
        %960 = vmatpush1.msra.mxu0 0.0
        %961 = vmatprep.subr.mxu0 0.0
        %962 = vmatpush1.msra.mxu0 0.0
        %963 = vmatprep.subr.mxu0 0.0
        %964 = vmatpush1.msra.mxu0 0.0
        %965 = vmatprep.subr.mxu0 0.0
        %966 = vmatpush1.msra.mxu0 0.0
        %967 = vmatprep.subr.mxu0 0.0
        %968 = vmatpush1.msra.mxu0 0.0
        %969 = vmatprep.subr.mxu0 0.0
        %970 = vmatpush1.msra.mxu0 0.0
        %971 = vmatprep.subr.mxu0 0.0
        %972 = vmatpush1.msra.mxu0 0.0
        %973 = vmatprep.subr.mxu0 0.0
        %974 = vmatpush1.msra.mxu0 0.0
        %975 = vmatprep.subr.mxu0 0.0
        %976 = vmatpush1.msra.mxu0 0.0
        %977 = vmatprep.subr.mxu0 0.0
        %978 = vmatpush1.msra.mxu0 0.0
        %979 = vmatprep.subr.mxu0 0.0
        %980 = vmatpush1.msra.mxu0 0.0
        %981 = vmatprep.subr.mxu0 0.0
        %982 = vmatpush1.msra.mxu0 0.0
        %983 = vmatprep.subr.mxu0 0.0
        %984 = vmatpush1.msra.mxu0 0.0
        %985 = vmatprep.subr.mxu0 0.0
        %986 = vmatpush1.msra.mxu0 0.0
        %987 = vmatprep.subr.mxu0 0.0
        %988 = vmatpush1.msra.mxu0 0.0
        %989 = vmatprep.subr.mxu0 0.0
        %990 = vmatpush1.msra.mxu0 0.0
        %991 = vmatprep.subr.mxu0 0.0
        %992 = vmatpush1.msra.mxu0 0.0
        %993 = vmatprep.subr.mxu0 0.0
        %994 = vmatpush1.msra.mxu0 0.0
        %995 = vmatprep.subr.mxu0 0.0
        %996 = vmatpush1.msra.mxu0 0.0
        %997 = vmatprep.subr.mxu0 0.0
        %998 = vmatpush1.msra.mxu0 0.0
        %999 = vmatprep.subr.mxu0 0.0
        %1000 = vmatpush1.msra.mxu0 0.0
        %1001 = vmatprep.subr.mxu0 0.0
        %1002 = vmatpush1.msra.mxu0 0.0
        %1003 = vmatprep.subr.mxu0 0.0
        %1004 = vmatpush1.msra.mxu0 0.0
        %1005 = vmatprep.subr.mxu0 0.0
        %1006 = vmatpush1.msra.mxu0 0.0
        %1007 = vmatprep.subr.mxu0 0.0
        %1008 = vmatpush1.msra.mxu0 0.0
        %1009 = vmatprep.subr.mxu0 0.0
        %1010 = vmatpush1.msra.mxu0 0.0
        %1011 = vmatprep.subr.mxu0 0.0
        %1012 = vmatpush1.msra.mxu0 0.0
        %1013 = vmatprep.subr.mxu0 0.0
        %1014 = vmatpush1.msra.mxu0 0.0
        %1015 = vmatprep.subr.mxu0 0.0
        %1016 = vmatpush1.msra.mxu0 0.0
        %1017 = vmatprep.subr.mxu0 0.0
        %1018 = vmatpush1.msra.mxu0 0.0
        %1019 = vmatprep.mubr.f32.mxu0 0.0
        %1020 = vmatmul.mubr.f32.gmra.mrb[0].mxu0 %v738
        %v1021 = vpop.f32.mrb[0].mxu0
        %v1022 = vadd.f32 %v591, %v1021
        %v1023 = vpop.f32.mrb[0].mxu0
        %v1024 = vadd.f32 %v593, %v1023
        %1025 = vdwg.mxu0
        %1026 = vmatprep.subr.mxu0 %v303
        %1027 = vmatpush1.msra.mxu0 %v301
        %1028 = vmatprep.subr.mxu0 0.0
        %1029 = vmatpush1.msra.mxu0 0.0
        %1030 = vmatprep.subr.mxu0 0.0
        %1031 = vmatpush1.msra.mxu0 0.0
        %1032 = vmatprep.subr.mxu0 0.0
        %1033 = vmatpush1.msra.mxu0 0.0
        %1034 = vmatprep.subr.mxu0 0.0
        %1035 = vmatpush1.msra.mxu0 0.0
        %1036 = vmatprep.subr.mxu0 0.0
        %1037 = vmatpush1.msra.mxu0 0.0
        %1038 = vmatprep.subr.mxu0 0.0
        %1039 = vmatpush1.msra.mxu0 0.0
        %1040 = vmatprep.subr.mxu0 0.0
        %1041 = vmatpush1.msra.mxu0 0.0
        %1042 = vmatprep.subr.mxu0 0.0
        %1043 = vmatpush1.msra.mxu0 0.0
        %1044 = vmatprep.subr.mxu0 0.0
        %1045 = vmatpush1.msra.mxu0 0.0
        %1046 = vmatprep.subr.mxu0 0.0
        %1047 = vmatpush1.msra.mxu0 0.0
        %1048 = vmatprep.subr.mxu0 0.0
        %1049 = vmatpush1.msra.mxu0 0.0
        %1050 = vmatprep.subr.mxu0 0.0
        %1051 = vmatpush1.msra.mxu0 0.0
        %1052 = vmatprep.subr.mxu0 0.0
        %1053 = vmatpush1.msra.mxu0 0.0
        %1054 = vmatprep.subr.mxu0 0.0
        %1055 = vmatpush1.msra.mxu0 0.0
        %1056 = vmatprep.subr.mxu0 0.0
        %1057 = vmatpush1.msra.mxu0 0.0
        %1058 = vmatprep.subr.mxu0 0.0
        %1059 = vmatpush1.msra.mxu0 0.0
        %1060 = vmatprep.subr.mxu0 0.0
        %1061 = vmatpush1.msra.mxu0 0.0
        %1062 = vmatprep.subr.mxu0 0.0
        %1063 = vmatpush1.msra.mxu0 0.0
        %1064 = vmatprep.subr.mxu0 0.0
        %1065 = vmatpush1.msra.mxu0 0.0
        %1066 = vmatprep.subr.mxu0 0.0
        %1067 = vmatpush1.msra.mxu0 0.0
        %1068 = vmatprep.subr.mxu0 0.0
        %1069 = vmatpush1.msra.mxu0 0.0
        %1070 = vmatprep.subr.mxu0 0.0
        %1071 = vmatpush1.msra.mxu0 0.0
        %1072 = vmatprep.subr.mxu0 0.0
        %1073 = vmatpush1.msra.mxu0 0.0
        %1074 = vmatprep.subr.mxu0 0.0
        %1075 = vmatpush1.msra.mxu0 0.0
        %1076 = vmatprep.subr.mxu0 0.0
        %1077 = vmatpush1.msra.mxu0 0.0
        %1078 = vmatprep.subr.mxu0 0.0
        %1079 = vmatpush1.msra.mxu0 0.0
        %1080 = vmatprep.subr.mxu0 0.0
        %1081 = vmatpush1.msra.mxu0 0.0
        %1082 = vmatprep.subr.mxu0 0.0
        %1083 = vmatpush1.msra.mxu0 0.0
        %1084 = vmatprep.subr.mxu0 0.0
        %1085 = vmatpush1.msra.mxu0 0.0
        %1086 = vmatprep.subr.mxu0 0.0
        %1087 = vmatpush1.msra.mxu0 0.0
        %1088 = vmatprep.subr.mxu0 0.0
        %1089 = vmatpush1.msra.mxu0 0.0
        %1090 = vmatprep.mubr.f32.mxu0 0.0
        %1091 = vmatmul.mubr.f32.gmra.mrb[0].mxu0 %v738
        %v1092 = vpop.f32.mrb[0].mxu0
        %v1093 = vadd.f32 %v662, %v1092
        %v1094 = vpop.f32.mrb[0].mxu0
        %v1095 = vadd.f32 %v664, %v1094
        %1096 = vdwg.mxu0
        %1097 = vmatprep.subr.mxu0 %v307
        %1098 = vmatpush1.msra.mxu0 %v305
        %1099 = vmatprep.subr.mxu0 0.0
        %1100 = vmatpush1.msra.mxu0 0.0
        %1101 = vmatprep.subr.mxu0 0.0
        %1102 = vmatpush1.msra.mxu0 0.0
        %1103 = vmatprep.subr.mxu0 0.0
        %1104 = vmatpush1.msra.mxu0 0.0
        %1105 = vmatprep.subr.mxu0 0.0
        %1106 = vmatpush1.msra.mxu0 0.0
        %1107 = vmatprep.subr.mxu0 0.0
        %1108 = vmatpush1.msra.mxu0 0.0
        %1109 = vmatprep.subr.mxu0 0.0
        %1110 = vmatpush1.msra.mxu0 0.0
        %1111 = vmatprep.subr.mxu0 0.0
        %1112 = vmatpush1.msra.mxu0 0.0
        %1113 = vmatprep.subr.mxu0 0.0
        %1114 = vmatpush1.msra.mxu0 0.0
        %1115 = vmatprep.subr.mxu0 0.0
        %1116 = vmatpush1.msra.mxu0 0.0
        %1117 = vmatprep.subr.mxu0 0.0
        %1118 = vmatpush1.msra.mxu0 0.0
        %1119 = vmatprep.subr.mxu0 0.0
        %1120 = vmatpush1.msra.mxu0 0.0
        %1121 = vmatprep.subr.mxu0 0.0
        %1122 = vmatpush1.msra.mxu0 0.0
        %1123 = vmatprep.subr.mxu0 0.0
        %1124 = vmatpush1.msra.mxu0 0.0
        %1125 = vmatprep.subr.mxu0 0.0
        %1126 = vmatpush1.msra.mxu0 0.0
        %1127 = vmatprep.subr.mxu0 0.0
        %1128 = vmatpush1.msra.mxu0 0.0
        %1129 = vmatprep.subr.mxu0 0.0
        %1130 = vmatpush1.msra.mxu0 0.0
        %1131 = vmatprep.subr.mxu0 0.0
        %1132 = vmatpush1.msra.mxu0 0.0
        %1133 = vmatprep.subr.mxu0 0.0
        %1134 = vmatpush1.msra.mxu0 0.0
        %1135 = vmatprep.subr.mxu0 0.0
        %1136 = vmatpush1.msra.mxu0 0.0
        %1137 = vmatprep.subr.mxu0 0.0
        %1138 = vmatpush1.msra.mxu0 0.0
        %1139 = vmatprep.subr.mxu0 0.0
        %1140 = vmatpush1.msra.mxu0 0.0
        %1141 = vmatprep.subr.mxu0 0.0
        %1142 = vmatpush1.msra.mxu0 0.0
        %1143 = vmatprep.subr.mxu0 0.0
        %1144 = vmatpush1.msra.mxu0 0.0
        %1145 = vmatprep.subr.mxu0 0.0
        %1146 = vmatpush1.msra.mxu0 0.0
        %1147 = vmatprep.subr.mxu0 0.0
        %1148 = vmatpush1.msra.mxu0 0.0
        %1149 = vmatprep.subr.mxu0 0.0
        %1150 = vmatpush1.msra.mxu0 0.0
        %1151 = vmatprep.subr.mxu0 0.0
        %1152 = vmatpush1.msra.mxu0 0.0
        %1153 = vmatprep.subr.mxu0 0.0
        %1154 = vmatpush1.msra.mxu0 0.0
        %1155 = vmatprep.subr.mxu0 0.0
        %1156 = vmatpush1.msra.mxu0 0.0
        %1157 = vmatprep.subr.mxu0 0.0
        %1158 = vmatpush1.msra.mxu0 0.0
        %1159 = vmatprep.subr.mxu0 0.0
        %1160 = vmatpush1.msra.mxu0 0.0
        %1161 = vmatprep.mubr.f32.mxu0 0.0
        %1162 = vmatmul.mubr.f32.gmra.mrb[0].mxu0 %v738
        %v1163 = vpop.f32.mrb[0].mxu0
        %v1164 = vadd.f32 %v733, %v1163
        %v1165 = vpop.f32.mrb[0].mxu0
        %v1166 = vadd.f32 %v735, %v1165
        %1167 = vdwg.mxu0
        %s1168 = scalar_lea.vmem %s3, 16
        %v1169 = vld [vmem:[%s1168] sm:$0xff]
        %v1170 = vcombine.high %v264, %v264
        %v1172 = vsel %vm282, %v1169, 0
        %v1174 = vsel %vm286, %v1170, 0
        %1176 = vmatprep.subr.mxu0 %v291
        %1177 = vmatpush1.msra.mxu0 %v289
        %1178 = vmatprep.subr.mxu0 0.0
        %1179 = vmatpush1.msra.mxu0 0.0
        %1180 = vmatprep.subr.mxu0 0.0
        %1181 = vmatpush1.msra.mxu0 0.0
        %1182 = vmatprep.subr.mxu0 0.0
        %1183 = vmatpush1.msra.mxu0 0.0
        %1184 = vmatprep.subr.mxu0 0.0
        %1185 = vmatpush1.msra.mxu0 0.0
        %1186 = vmatprep.subr.mxu0 0.0
        %1187 = vmatpush1.msra.mxu0 0.0
        %1188 = vmatprep.subr.mxu0 0.0
        %1189 = vmatpush1.msra.mxu0 0.0
        %1190 = vmatprep.subr.mxu0 0.0
        %1191 = vmatpush1.msra.mxu0 0.0
        %1192 = vmatprep.subr.mxu0 0.0
        %1193 = vmatpush1.msra.mxu0 0.0
        %1194 = vmatprep.subr.mxu0 0.0
        %1195 = vmatpush1.msra.mxu0 0.0
        %1196 = vmatprep.subr.mxu0 0.0
        %1197 = vmatpush1.msra.mxu0 0.0
        %1198 = vmatprep.subr.mxu0 0.0
        %1199 = vmatpush1.msra.mxu0 0.0
        %1200 = vmatprep.subr.mxu0 0.0
        %1201 = vmatpush1.msra.mxu0 0.0
        %1202 = vmatprep.subr.mxu0 0.0
        %1203 = vmatpush1.msra.mxu0 0.0
        %1204 = vmatprep.subr.mxu0 0.0
        %1205 = vmatpush1.msra.mxu0 0.0
        %1206 = vmatprep.subr.mxu0 0.0
        %1207 = vmatpush1.msra.mxu0 0.0
        %1208 = vmatprep.subr.mxu0 0.0
        %1209 = vmatpush1.msra.mxu0 0.0
        %1210 = vmatprep.subr.mxu0 0.0
        %1211 = vmatpush1.msra.mxu0 0.0
        %1212 = vmatprep.subr.mxu0 0.0
        %1213 = vmatpush1.msra.mxu0 0.0
        %1214 = vmatprep.subr.mxu0 0.0
        %1215 = vmatpush1.msra.mxu0 0.0
        %1216 = vmatprep.subr.mxu0 0.0
        %1217 = vmatpush1.msra.mxu0 0.0
        %1218 = vmatprep.subr.mxu0 0.0
        %1219 = vmatpush1.msra.mxu0 0.0
        %1220 = vmatprep.subr.mxu0 0.0
        %1221 = vmatpush1.msra.mxu0 0.0
        %1222 = vmatprep.subr.mxu0 0.0
        %1223 = vmatpush1.msra.mxu0 0.0
        %1224 = vmatprep.subr.mxu0 0.0
        %1225 = vmatpush1.msra.mxu0 0.0
        %1226 = vmatprep.subr.mxu0 0.0
        %1227 = vmatpush1.msra.mxu0 0.0
        %1228 = vmatprep.subr.mxu0 0.0
        %1229 = vmatpush1.msra.mxu0 0.0
        %1230 = vmatprep.subr.mxu0 0.0
        %1231 = vmatpush1.msra.mxu0 0.0
        %1232 = vmatprep.subr.mxu0 0.0
        %1233 = vmatpush1.msra.mxu0 0.0
        %1234 = vmatprep.subr.mxu0 0.0
        %1235 = vmatpush1.msra.mxu0 0.0
        %1236 = vmatprep.subr.mxu0 0.0
        %1237 = vmatpush1.msra.mxu0 0.0
        %1238 = vmatprep.subr.mxu0 0.0
        %1239 = vmatpush1.msra.mxu0 0.0
        %1240 = vmatprep.mubr.f32.mxu0 0.0
        %1241 = vmatmul.mubr.f32.gmra.mrb[0].mxu0 %v1172
        %v1242 = vpop.f32.mrb[0].mxu0
        %v1243 = vadd.f32 0.0, %v1242
        %v1244 = vpop.f32.mrb[0].mxu0
        %v1245 = vadd.f32 0.0, %v1244
        %1246 = vdwg.mxu0
        %1247 = vmatprep.subr.mxu0 %v295
        %1248 = vmatpush1.msra.mxu0 %v293
        %1249 = vmatprep.subr.mxu0 0.0
        %1250 = vmatpush1.msra.mxu0 0.0
        %1251 = vmatprep.subr.mxu0 0.0
        %1252 = vmatpush1.msra.mxu0 0.0
        %1253 = vmatprep.subr.mxu0 0.0
        %1254 = vmatpush1.msra.mxu0 0.0
        %1255 = vmatprep.subr.mxu0 0.0
        %1256 = vmatpush1.msra.mxu0 0.0
        %1257 = vmatprep.subr.mxu0 0.0
        %1258 = vmatpush1.msra.mxu0 0.0
        %1259 = vmatprep.subr.mxu0 0.0
        %1260 = vmatpush1.msra.mxu0 0.0
        %1261 = vmatprep.subr.mxu0 0.0
        %1262 = vmatpush1.msra.mxu0 0.0
        %1263 = vmatprep.subr.mxu0 0.0
        %1264 = vmatpush1.msra.mxu0 0.0
        %1265 = vmatprep.subr.mxu0 0.0
        %1266 = vmatpush1.msra.mxu0 0.0
        %1267 = vmatprep.subr.mxu0 0.0
        %1268 = vmatpush1.msra.mxu0 0.0
        %1269 = vmatprep.subr.mxu0 0.0
        %1270 = vmatpush1.msra.mxu0 0.0
        %1271 = vmatprep.subr.mxu0 0.0
        %1272 = vmatpush1.msra.mxu0 0.0
        %1273 = vmatprep.subr.mxu0 0.0
        %1274 = vmatpush1.msra.mxu0 0.0
        %1275 = vmatprep.subr.mxu0 0.0
        %1276 = vmatpush1.msra.mxu0 0.0
        %1277 = vmatprep.subr.mxu0 0.0
        %1278 = vmatpush1.msra.mxu0 0.0
        %1279 = vmatprep.subr.mxu0 0.0
        %1280 = vmatpush1.msra.mxu0 0.0
        %1281 = vmatprep.subr.mxu0 0.0
        %1282 = vmatpush1.msra.mxu0 0.0
        %1283 = vmatprep.subr.mxu0 0.0
        %1284 = vmatpush1.msra.mxu0 0.0
        %1285 = vmatprep.subr.mxu0 0.0
        %1286 = vmatpush1.msra.mxu0 0.0
        %1287 = vmatprep.subr.mxu0 0.0
        %1288 = vmatpush1.msra.mxu0 0.0
        %1289 = vmatprep.subr.mxu0 0.0
        %1290 = vmatpush1.msra.mxu0 0.0
        %1291 = vmatprep.subr.mxu0 0.0
        %1292 = vmatpush1.msra.mxu0 0.0
        %1293 = vmatprep.subr.mxu0 0.0
        %1294 = vmatpush1.msra.mxu0 0.0
        %1295 = vmatprep.subr.mxu0 0.0
        %1296 = vmatpush1.msra.mxu0 0.0
        %1297 = vmatprep.subr.mxu0 0.0
        %1298 = vmatpush1.msra.mxu0 0.0
        %1299 = vmatprep.subr.mxu0 0.0
        %1300 = vmatpush1.msra.mxu0 0.0
        %1301 = vmatprep.subr.mxu0 0.0
        %1302 = vmatpush1.msra.mxu0 0.0
        %1303 = vmatprep.subr.mxu0 0.0
        %1304 = vmatpush1.msra.mxu0 0.0
        %1305 = vmatprep.subr.mxu0 0.0
        %1306 = vmatpush1.msra.mxu0 0.0
        %1307 = vmatprep.subr.mxu0 0.0
        %1308 = vmatpush1.msra.mxu0 0.0
        %1309 = vmatprep.subr.mxu0 0.0
        %1310 = vmatpush1.msra.mxu0 0.0
        %1311 = vmatprep.mubr.f32.mxu0 0.0
        %1312 = vmatmul.mubr.f32.gmra.mrb[0].mxu0 %v1172
        %v1313 = vpop.f32.mrb[0].mxu0
        %v1314 = vadd.f32 0.0, %v1313
        %v1315 = vpop.f32.mrb[0].mxu0
        %v1316 = vadd.f32 0.0, %v1315
        %1317 = vdwg.mxu0
        %1318 = vmatprep.subr.mxu0 %v299
        %1319 = vmatpush1.msra.mxu0 %v297
        %1320 = vmatprep.subr.mxu0 0.0
        %1321 = vmatpush1.msra.mxu0 0.0
        %1322 = vmatprep.subr.mxu0 0.0
        %1323 = vmatpush1.msra.mxu0 0.0
        %1324 = vmatprep.subr.mxu0 0.0
        %1325 = vmatpush1.msra.mxu0 0.0
        %1326 = vmatprep.subr.mxu0 0.0
        %1327 = vmatpush1.msra.mxu0 0.0
        %1328 = vmatprep.subr.mxu0 0.0
        %1329 = vmatpush1.msra.mxu0 0.0
        %1330 = vmatprep.subr.mxu0 0.0
        %1331 = vmatpush1.msra.mxu0 0.0
        %1332 = vmatprep.subr.mxu0 0.0
        %1333 = vmatpush1.msra.mxu0 0.0
        %1334 = vmatprep.subr.mxu0 0.0
        %1335 = vmatpush1.msra.mxu0 0.0
        %1336 = vmatprep.subr.mxu0 0.0
        %1337 = vmatpush1.msra.mxu0 0.0
        %1338 = vmatprep.subr.mxu0 0.0
        %1339 = vmatpush1.msra.mxu0 0.0
        %1340 = vmatprep.subr.mxu0 0.0
        %1341 = vmatpush1.msra.mxu0 0.0
        %1342 = vmatprep.subr.mxu0 0.0
        %1343 = vmatpush1.msra.mxu0 0.0
        %1344 = vmatprep.subr.mxu0 0.0
        %1345 = vmatpush1.msra.mxu0 0.0
        %1346 = vmatprep.subr.mxu0 0.0
        %1347 = vmatpush1.msra.mxu0 0.0
        %1348 = vmatprep.subr.mxu0 0.0
        %1349 = vmatpush1.msra.mxu0 0.0
        %1350 = vmatprep.subr.mxu0 0.0
        %1351 = vmatpush1.msra.mxu0 0.0
        %1352 = vmatprep.subr.mxu0 0.0
        %1353 = vmatpush1.msra.mxu0 0.0
        %1354 = vmatprep.subr.mxu0 0.0
        %1355 = vmatpush1.msra.mxu0 0.0
        %1356 = vmatprep.subr.mxu0 0.0
        %1357 = vmatpush1.msra.mxu0 0.0
        %1358 = vmatprep.subr.mxu0 0.0
        %1359 = vmatpush1.msra.mxu0 0.0
        %1360 = vmatprep.subr.mxu0 0.0
        %1361 = vmatpush1.msra.mxu0 0.0
        %1362 = vmatprep.subr.mxu0 0.0
        %1363 = vmatpush1.msra.mxu0 0.0
        %1364 = vmatprep.subr.mxu0 0.0
        %1365 = vmatpush1.msra.mxu0 0.0
        %1366 = vmatprep.subr.mxu0 0.0
        %1367 = vmatpush1.msra.mxu0 0.0
        %1368 = vmatprep.subr.mxu0 0.0
        %1369 = vmatpush1.msra.mxu0 0.0
        %1370 = vmatprep.subr.mxu0 0.0
        %1371 = vmatpush1.msra.mxu0 0.0
        %1372 = vmatprep.subr.mxu0 0.0
        %1373 = vmatpush1.msra.mxu0 0.0
        %1374 = vmatprep.subr.mxu0 0.0
        %1375 = vmatpush1.msra.mxu0 0.0
        %1376 = vmatprep.subr.mxu0 0.0
        %1377 = vmatpush1.msra.mxu0 0.0
        %1378 = vmatprep.subr.mxu0 0.0
        %1379 = vmatpush1.msra.mxu0 0.0
        %1380 = vmatprep.subr.mxu0 0.0
        %1381 = vmatpush1.msra.mxu0 0.0
        %1382 = vmatprep.mubr.f32.mxu0 0.0
        %1383 = vmatmul.mubr.f32.gmra.mrb[0].mxu0 %v1172
        %v1384 = vpop.f32.mrb[0].mxu0
        %v1385 = vadd.f32 0.0, %v1384
        %v1386 = vpop.f32.mrb[0].mxu0
        %v1387 = vadd.f32 0.0, %v1386
        %1388 = vdwg.mxu0
        %1389 = vmatprep.subr.mxu0 %v303
        %1390 = vmatpush1.msra.mxu0 %v301
        %1391 = vmatprep.subr.mxu0 0.0
        %1392 = vmatpush1.msra.mxu0 0.0
        %1393 = vmatprep.subr.mxu0 0.0
        %1394 = vmatpush1.msra.mxu0 0.0
        %1395 = vmatprep.subr.mxu0 0.0
        %1396 = vmatpush1.msra.mxu0 0.0
        %1397 = vmatprep.subr.mxu0 0.0
        %1398 = vmatpush1.msra.mxu0 0.0
        %1399 = vmatprep.subr.mxu0 0.0
        %1400 = vmatpush1.msra.mxu0 0.0
        %1401 = vmatprep.subr.mxu0 0.0
        %1402 = vmatpush1.msra.mxu0 0.0
        %1403 = vmatprep.subr.mxu0 0.0
        %1404 = vmatpush1.msra.mxu0 0.0
        %1405 = vmatprep.subr.mxu0 0.0
        %1406 = vmatpush1.msra.mxu0 0.0
        %1407 = vmatprep.subr.mxu0 0.0
        %1408 = vmatpush1.msra.mxu0 0.0
        %1409 = vmatprep.subr.mxu0 0.0
        %1410 = vmatpush1.msra.mxu0 0.0
        %1411 = vmatprep.subr.mxu0 0.0
        %1412 = vmatpush1.msra.mxu0 0.0
        %1413 = vmatprep.subr.mxu0 0.0
        %1414 = vmatpush1.msra.mxu0 0.0
        %1415 = vmatprep.subr.mxu0 0.0
        %1416 = vmatpush1.msra.mxu0 0.0
        %1417 = vmatprep.subr.mxu0 0.0
        %1418 = vmatpush1.msra.mxu0 0.0
        %1419 = vmatprep.subr.mxu0 0.0
        %1420 = vmatpush1.msra.mxu0 0.0
        %1421 = vmatprep.subr.mxu0 0.0
        %1422 = vmatpush1.msra.mxu0 0.0
        %1423 = vmatprep.subr.mxu0 0.0
        %1424 = vmatpush1.msra.mxu0 0.0
        %1425 = vmatprep.subr.mxu0 0.0
        %1426 = vmatpush1.msra.mxu0 0.0
        %1427 = vmatprep.subr.mxu0 0.0
        %1428 = vmatpush1.msra.mxu0 0.0
        %1429 = vmatprep.subr.mxu0 0.0
        %1430 = vmatpush1.msra.mxu0 0.0
        %1431 = vmatprep.subr.mxu0 0.0
        %1432 = vmatpush1.msra.mxu0 0.0
        %1433 = vmatprep.subr.mxu0 0.0
        %1434 = vmatpush1.msra.mxu0 0.0
        %1435 = vmatprep.subr.mxu0 0.0
        %1436 = vmatpush1.msra.mxu0 0.0
        %1437 = vmatprep.subr.mxu0 0.0
        %1438 = vmatpush1.msra.mxu0 0.0
        %1439 = vmatprep.subr.mxu0 0.0
        %1440 = vmatpush1.msra.mxu0 0.0
        %1441 = vmatprep.subr.mxu0 0.0
        %1442 = vmatpush1.msra.mxu0 0.0
        %1443 = vmatprep.subr.mxu0 0.0
        %1444 = vmatpush1.msra.mxu0 0.0
        %1445 = vmatprep.subr.mxu0 0.0
        %1446 = vmatpush1.msra.mxu0 0.0
        %1447 = vmatprep.subr.mxu0 0.0
        %1448 = vmatpush1.msra.mxu0 0.0
        %1449 = vmatprep.subr.mxu0 0.0
        %1450 = vmatpush1.msra.mxu0 0.0
        %1451 = vmatprep.subr.mxu0 0.0
        %1452 = vmatpush1.msra.mxu0 0.0
        %1453 = vmatprep.mubr.f32.mxu0 0.0
        %1454 = vmatmul.mubr.f32.gmra.mrb[0].mxu0 %v1172
        %v1455 = vpop.f32.mrb[0].mxu0
        %v1456 = vadd.f32 0.0, %v1455
        %v1457 = vpop.f32.mrb[0].mxu0
        %v1458 = vadd.f32 0.0, %v1457
        %1459 = vdwg.mxu0
        %1460 = vmatprep.subr.mxu0 %v307
        %1461 = vmatpush1.msra.mxu0 %v305
        %1462 = vmatprep.subr.mxu0 0.0
        %1463 = vmatpush1.msra.mxu0 0.0
        %1464 = vmatprep.subr.mxu0 0.0
        %1465 = vmatpush1.msra.mxu0 0.0
        %1466 = vmatprep.subr.mxu0 0.0
        %1467 = vmatpush1.msra.mxu0 0.0
        %1468 = vmatprep.subr.mxu0 0.0
        %1469 = vmatpush1.msra.mxu0 0.0
        %1470 = vmatprep.subr.mxu0 0.0
        %1471 = vmatpush1.msra.mxu0 0.0
        %1472 = vmatprep.subr.mxu0 0.0
        %1473 = vmatpush1.msra.mxu0 0.0
        %1474 = vmatprep.subr.mxu0 0.0
        %1475 = vmatpush1.msra.mxu0 0.0
        %1476 = vmatprep.subr.mxu0 0.0
        %1477 = vmatpush1.msra.mxu0 0.0
        %1478 = vmatprep.subr.mxu0 0.0
        %1479 = vmatpush1.msra.mxu0 0.0
        %1480 = vmatprep.subr.mxu0 0.0
        %1481 = vmatpush1.msra.mxu0 0.0
        %1482 = vmatprep.subr.mxu0 0.0
        %1483 = vmatpush1.msra.mxu0 0.0
        %1484 = vmatprep.subr.mxu0 0.0
        %1485 = vmatpush1.msra.mxu0 0.0
        %1486 = vmatprep.subr.mxu0 0.0
        %1487 = vmatpush1.msra.mxu0 0.0
        %1488 = vmatprep.subr.mxu0 0.0
        %1489 = vmatpush1.msra.mxu0 0.0
        %1490 = vmatprep.subr.mxu0 0.0
        %1491 = vmatpush1.msra.mxu0 0.0
        %1492 = vmatprep.subr.mxu0 0.0
        %1493 = vmatpush1.msra.mxu0 0.0
        %1494 = vmatprep.subr.mxu0 0.0
        %1495 = vmatpush1.msra.mxu0 0.0
        %1496 = vmatprep.subr.mxu0 0.0
        %1497 = vmatpush1.msra.mxu0 0.0
        %1498 = vmatprep.subr.mxu0 0.0
        %1499 = vmatpush1.msra.mxu0 0.0
        %1500 = vmatprep.subr.mxu0 0.0
        %1501 = vmatpush1.msra.mxu0 0.0
        %1502 = vmatprep.subr.mxu0 0.0
        %1503 = vmatpush1.msra.mxu0 0.0
        %1504 = vmatprep.subr.mxu0 0.0
        %1505 = vmatpush1.msra.mxu0 0.0
        %1506 = vmatprep.subr.mxu0 0.0
        %1507 = vmatpush1.msra.mxu0 0.0
        %1508 = vmatprep.subr.mxu0 0.0
        %1509 = vmatpush1.msra.mxu0 0.0
        %1510 = vmatprep.subr.mxu0 0.0
        %1511 = vmatpush1.msra.mxu0 0.0
        %1512 = vmatprep.subr.mxu0 0.0
        %1513 = vmatpush1.msra.mxu0 0.0
        %1514 = vmatprep.subr.mxu0 0.0
        %1515 = vmatpush1.msra.mxu0 0.0
        %1516 = vmatprep.subr.mxu0 0.0
        %1517 = vmatpush1.msra.mxu0 0.0
        %1518 = vmatprep.subr.mxu0 0.0
        %1519 = vmatpush1.msra.mxu0 0.0
        %1520 = vmatprep.subr.mxu0 0.0
        %1521 = vmatpush1.msra.mxu0 0.0
        %1522 = vmatprep.subr.mxu0 0.0
        %1523 = vmatpush1.msra.mxu0 0.0
        %1524 = vmatprep.mubr.f32.mxu0 0.0
        %1525 = vmatmul.mubr.f32.gmra.mrb[0].mxu0 %v1172
        %v1526 = vpop.f32.mrb[0].mxu0
        %v1527 = vadd.f32 0.0, %v1526
        %v1528 = vpop.f32.mrb[0].mxu0
        %v1529 = vadd.f32 0.0, %v1528
        %1530 = vdwg.mxu0
        %1531 = vmatprep.subr.mxu0 %v1174
        %1532 = vmatpush1.msra.mxu0 %v309
        %1533 = vmatprep.subr.mxu0 0.0
        %1534 = vmatpush1.msra.mxu0 0.0
        %1535 = vmatprep.subr.mxu0 0.0
        %1536 = vmatpush1.msra.mxu0 0.0
        %1537 = vmatprep.subr.mxu0 0.0
        %1538 = vmatpush1.msra.mxu0 0.0
        %1539 = vmatprep.subr.mxu0 0.0
        %1540 = vmatpush1.msra.mxu0 0.0
        %1541 = vmatprep.subr.mxu0 0.0
        %1542 = vmatpush1.msra.mxu0 0.0
        %1543 = vmatprep.subr.mxu0 0.0
        %1544 = vmatpush1.msra.mxu0 0.0
        %1545 = vmatprep.subr.mxu0 0.0
        %1546 = vmatpush1.msra.mxu0 0.0
        %1547 = vmatprep.subr.mxu0 0.0
        %1548 = vmatpush1.msra.mxu0 0.0
        %1549 = vmatprep.subr.mxu0 0.0
        %1550 = vmatpush1.msra.mxu0 0.0
        %1551 = vmatprep.subr.mxu0 0.0
        %1552 = vmatpush1.msra.mxu0 0.0
        %1553 = vmatprep.subr.mxu0 0.0
        %1554 = vmatpush1.msra.mxu0 0.0
        %1555 = vmatprep.subr.mxu0 0.0
        %1556 = vmatpush1.msra.mxu0 0.0
        %1557 = vmatprep.subr.mxu0 0.0
        %1558 = vmatpush1.msra.mxu0 0.0
        %1559 = vmatprep.subr.mxu0 0.0
        %1560 = vmatpush1.msra.mxu0 0.0
        %1561 = vmatprep.subr.mxu0 0.0
        %1562 = vmatpush1.msra.mxu0 0.0
        %1563 = vmatprep.subr.mxu0 0.0
        %1564 = vmatpush1.msra.mxu0 0.0
        %1565 = vmatprep.subr.mxu0 0.0
        %1566 = vmatpush1.msra.mxu0 0.0
        %1567 = vmatprep.subr.mxu0 0.0
        %1568 = vmatpush1.msra.mxu0 0.0
        %1569 = vmatprep.subr.mxu0 0.0
        %1570 = vmatpush1.msra.mxu0 0.0
        %1571 = vmatprep.subr.mxu0 0.0
        %1572 = vmatpush1.msra.mxu0 0.0
        %1573 = vmatprep.subr.mxu0 0.0
        %1574 = vmatpush1.msra.mxu0 0.0
        %1575 = vmatprep.subr.mxu0 0.0
        %1576 = vmatpush1.msra.mxu0 0.0
        %1577 = vmatprep.subr.mxu0 0.0
        %1578 = vmatpush1.msra.mxu0 0.0
        %1579 = vmatprep.subr.mxu0 0.0
        %1580 = vmatpush1.msra.mxu0 0.0
        %1581 = vmatprep.subr.mxu0 0.0
        %1582 = vmatpush1.msra.mxu0 0.0
        %1583 = vmatprep.subr.mxu0 0.0
        %1584 = vmatpush1.msra.mxu0 0.0
        %1585 = vmatprep.subr.mxu0 0.0
        %1586 = vmatpush1.msra.mxu0 0.0
        %1587 = vmatprep.subr.mxu0 0.0
        %1588 = vmatpush1.msra.mxu0 0.0
        %1589 = vmatprep.subr.mxu0 0.0
        %1590 = vmatpush1.msra.mxu0 0.0
        %1591 = vmatprep.subr.mxu0 0.0
        %1592 = vmatpush1.msra.mxu0 0.0
        %1593 = vmatprep.subr.mxu0 0.0
        %1594 = vmatpush1.msra.mxu0 0.0
        %1595 = vmatprep.mubr.f32.mxu0 0.0
        %1596 = vmatmul.mubr.f32.gmra.mrb[0].mxu0 %v1172
        %v1597 = vpop.f32.mrb[0].mxu0
        %v1598 = vadd.f32 0.0, %v1597
        %v1599 = vpop.f32.mrb[0].mxu0
        %v1600 = vadd.f32 0.0, %v1599
        %1601 = vdwg.mxu0
        %v1602 = vadd.f32 %v809, %v1243
        %v1603 = vadd.f32 %v811, %v1245
        %v1604 = vadd.f32 %v880, %v1314
        %v1605 = vadd.f32 %v882, %v1316
        %v1606 = vadd.f32 %v951, %v1385
        %v1607 = vadd.f32 %v953, %v1387
        %v1608 = vadd.f32 %v1022, %v1456
        %v1609 = vadd.f32 %v1024, %v1458
        %v1610 = vadd.f32 %v1093, %v1527
        %v1611 = vadd.f32 %v1095, %v1529
        %v1612 = vadd.f32 %v1164, %v1598
        %v1613 = vadd.f32 %v1166, %v1600
        %s1614 = scalar_lea.vmem %s3, 24
        %v1615 = vld [vmem:[%s1614] sm:$0xff]
        %v1618 = vsel %vm282, %v1615, 0
        %v1620 = vsel %vm286, %v265, 0
        %1622 = vmatprep.subr.mxu0 %v293
        %1623 = vmatpush1.msra.mxu0 %v291
        %1624 = vmatprep.subr.mxu0 0.0
        %1625 = vmatpush1.msra.mxu0 0.0
        %1626 = vmatprep.subr.mxu0 0.0
        %1627 = vmatpush1.msra.mxu0 0.0
        %1628 = vmatprep.subr.mxu0 0.0
        %1629 = vmatpush1.msra.mxu0 0.0
        %1630 = vmatprep.subr.mxu0 0.0
        %1631 = vmatpush1.msra.mxu0 0.0
        %1632 = vmatprep.subr.mxu0 0.0
        %1633 = vmatpush1.msra.mxu0 0.0
        %1634 = vmatprep.subr.mxu0 0.0
        %1635 = vmatpush1.msra.mxu0 0.0
        %1636 = vmatprep.subr.mxu0 0.0
        %1637 = vmatpush1.msra.mxu0 0.0
        %1638 = vmatprep.subr.mxu0 0.0
        %1639 = vmatpush1.msra.mxu0 0.0
        %1640 = vmatprep.subr.mxu0 0.0
        %1641 = vmatpush1.msra.mxu0 0.0
        %1642 = vmatprep.subr.mxu0 0.0
        %1643 = vmatpush1.msra.mxu0 0.0
        %1644 = vmatprep.subr.mxu0 0.0
        %1645 = vmatpush1.msra.mxu0 0.0
        %1646 = vmatprep.subr.mxu0 0.0
        %1647 = vmatpush1.msra.mxu0 0.0
        %1648 = vmatprep.subr.mxu0 0.0
        %1649 = vmatpush1.msra.mxu0 0.0
        %1650 = vmatprep.subr.mxu0 0.0
        %1651 = vmatpush1.msra.mxu0 0.0
        %1652 = vmatprep.subr.mxu0 0.0
        %1653 = vmatpush1.msra.mxu0 0.0
        %1654 = vmatprep.subr.mxu0 0.0
        %1655 = vmatpush1.msra.mxu0 0.0
        %1656 = vmatprep.subr.mxu0 0.0
        %1657 = vmatpush1.msra.mxu0 0.0
        %1658 = vmatprep.subr.mxu0 0.0
        %1659 = vmatpush1.msra.mxu0 0.0
        %1660 = vmatprep.subr.mxu0 0.0
        %1661 = vmatpush1.msra.mxu0 0.0
        %1662 = vmatprep.subr.mxu0 0.0
        %1663 = vmatpush1.msra.mxu0 0.0
        %1664 = vmatprep.subr.mxu0 0.0
        %1665 = vmatpush1.msra.mxu0 0.0
        %1666 = vmatprep.subr.mxu0 0.0
        %1667 = vmatpush1.msra.mxu0 0.0
        %1668 = vmatprep.subr.mxu0 0.0
        %1669 = vmatpush1.msra.mxu0 0.0
        %1670 = vmatprep.subr.mxu0 0.0
        %1671 = vmatpush1.msra.mxu0 0.0
        %1672 = vmatprep.subr.mxu0 0.0
        %1673 = vmatpush1.msra.mxu0 0.0
        %1674 = vmatprep.subr.mxu0 0.0
        %1675 = vmatpush1.msra.mxu0 0.0
        %1676 = vmatprep.subr.mxu0 0.0
        %1677 = vmatpush1.msra.mxu0 0.0
        %1678 = vmatprep.subr.mxu0 0.0
        %1679 = vmatpush1.msra.mxu0 0.0
        %1680 = vmatprep.subr.mxu0 0.0
        %1681 = vmatpush1.msra.mxu0 0.0
        %1682 = vmatprep.subr.mxu0 0.0
        %1683 = vmatpush1.msra.mxu0 0.0
        %1684 = vmatprep.subr.mxu0 0.0
        %1685 = vmatpush1.msra.mxu0 0.0
        %1686 = vmatprep.mubr.f32.mxu0 0.0
        %1687 = vmatmul.mubr.f32.gmra.mrb[0].mxu0 %v1618
        %v1688 = vpop.f32.mrb[0].mxu0
        %v1689 = vadd.f32 0.0, %v1688
        %v1690 = vpop.f32.mrb[0].mxu0
        %v1691 = vadd.f32 0.0, %v1690
        %1692 = vdwg.mxu0
        %1693 = vmatprep.subr.mxu0 %v297
        %1694 = vmatpush1.msra.mxu0 %v295
        %1695 = vmatprep.subr.mxu0 0.0
        %1696 = vmatpush1.msra.mxu0 0.0
        %1697 = vmatprep.subr.mxu0 0.0
        %1698 = vmatpush1.msra.mxu0 0.0
        %1699 = vmatprep.subr.mxu0 0.0
        %1700 = vmatpush1.msra.mxu0 0.0
        %1701 = vmatprep.subr.mxu0 0.0
        %1702 = vmatpush1.msra.mxu0 0.0
        %1703 = vmatprep.subr.mxu0 0.0
        %1704 = vmatpush1.msra.mxu0 0.0
        %1705 = vmatprep.subr.mxu0 0.0
        %1706 = vmatpush1.msra.mxu0 0.0
        %1707 = vmatprep.subr.mxu0 0.0
        %1708 = vmatpush1.msra.mxu0 0.0
        %1709 = vmatprep.subr.mxu0 0.0
        %1710 = vmatpush1.msra.mxu0 0.0
        %1711 = vmatprep.subr.mxu0 0.0
        %1712 = vmatpush1.msra.mxu0 0.0
        %1713 = vmatprep.subr.mxu0 0.0
        %1714 = vmatpush1.msra.mxu0 0.0
        %1715 = vmatprep.subr.mxu0 0.0
        %1716 = vmatpush1.msra.mxu0 0.0
        %1717 = vmatprep.subr.mxu0 0.0
        %1718 = vmatpush1.msra.mxu0 0.0
        %1719 = vmatprep.subr.mxu0 0.0
        %1720 = vmatpush1.msra.mxu0 0.0
        %1721 = vmatprep.subr.mxu0 0.0
        %1722 = vmatpush1.msra.mxu0 0.0
        %1723 = vmatprep.subr.mxu0 0.0
        %1724 = vmatpush1.msra.mxu0 0.0
        %1725 = vmatprep.subr.mxu0 0.0
        %1726 = vmatpush1.msra.mxu0 0.0
        %1727 = vmatprep.subr.mxu0 0.0
        %1728 = vmatpush1.msra.mxu0 0.0
        %1729 = vmatprep.subr.mxu0 0.0
        %1730 = vmatpush1.msra.mxu0 0.0
        %1731 = vmatprep.subr.mxu0 0.0
        %1732 = vmatpush1.msra.mxu0 0.0
        %1733 = vmatprep.subr.mxu0 0.0
        %1734 = vmatpush1.msra.mxu0 0.0
        %1735 = vmatprep.subr.mxu0 0.0
        %1736 = vmatpush1.msra.mxu0 0.0
        %1737 = vmatprep.subr.mxu0 0.0
        %1738 = vmatpush1.msra.mxu0 0.0
        %1739 = vmatprep.subr.mxu0 0.0
        %1740 = vmatpush1.msra.mxu0 0.0
        %1741 = vmatprep.subr.mxu0 0.0
        %1742 = vmatpush1.msra.mxu0 0.0
        %1743 = vmatprep.subr.mxu0 0.0
        %1744 = vmatpush1.msra.mxu0 0.0
        %1745 = vmatprep.subr.mxu0 0.0
        %1746 = vmatpush1.msra.mxu0 0.0
        %1747 = vmatprep.subr.mxu0 0.0
        %1748 = vmatpush1.msra.mxu0 0.0
        %1749 = vmatprep.subr.mxu0 0.0
        %1750 = vmatpush1.msra.mxu0 0.0
        %1751 = vmatprep.subr.mxu0 0.0
        %1752 = vmatpush1.msra.mxu0 0.0
        %1753 = vmatprep.subr.mxu0 0.0
        %1754 = vmatpush1.msra.mxu0 0.0
        %1755 = vmatprep.subr.mxu0 0.0
        %1756 = vmatpush1.msra.mxu0 0.0
        %1757 = vmatprep.mubr.f32.mxu0 0.0
        %1758 = vmatmul.mubr.f32.gmra.mrb[0].mxu0 %v1618
        %v1759 = vpop.f32.mrb[0].mxu0
        %v1760 = vadd.f32 0.0, %v1759
        %v1761 = vpop.f32.mrb[0].mxu0
        %v1762 = vadd.f32 0.0, %v1761
        %1763 = vdwg.mxu0
        %1764 = vmatprep.subr.mxu0 %v301
        %1765 = vmatpush1.msra.mxu0 %v299
        %1766 = vmatprep.subr.mxu0 0.0
        %1767 = vmatpush1.msra.mxu0 0.0
        %1768 = vmatprep.subr.mxu0 0.0
        %1769 = vmatpush1.msra.mxu0 0.0
        %1770 = vmatprep.subr.mxu0 0.0
        %1771 = vmatpush1.msra.mxu0 0.0
        %1772 = vmatprep.subr.mxu0 0.0
        %1773 = vmatpush1.msra.mxu0 0.0
        %1774 = vmatprep.subr.mxu0 0.0
        %1775 = vmatpush1.msra.mxu0 0.0
        %1776 = vmatprep.subr.mxu0 0.0
        %1777 = vmatpush1.msra.mxu0 0.0
        %1778 = vmatprep.subr.mxu0 0.0
        %1779 = vmatpush1.msra.mxu0 0.0
        %1780 = vmatprep.subr.mxu0 0.0
        %1781 = vmatpush1.msra.mxu0 0.0
        %1782 = vmatprep.subr.mxu0 0.0
        %1783 = vmatpush1.msra.mxu0 0.0
        %1784 = vmatprep.subr.mxu0 0.0
        %1785 = vmatpush1.msra.mxu0 0.0
        %1786 = vmatprep.subr.mxu0 0.0
        %1787 = vmatpush1.msra.mxu0 0.0
        %1788 = vmatprep.subr.mxu0 0.0
        %1789 = vmatpush1.msra.mxu0 0.0
        %1790 = vmatprep.subr.mxu0 0.0
        %1791 = vmatpush1.msra.mxu0 0.0
        %1792 = vmatprep.subr.mxu0 0.0
        %1793 = vmatpush1.msra.mxu0 0.0
        %1794 = vmatprep.subr.mxu0 0.0
        %1795 = vmatpush1.msra.mxu0 0.0
        %1796 = vmatprep.subr.mxu0 0.0
        %1797 = vmatpush1.msra.mxu0 0.0
        %1798 = vmatprep.subr.mxu0 0.0
        %1799 = vmatpush1.msra.mxu0 0.0
        %1800 = vmatprep.subr.mxu0 0.0
        %1801 = vmatpush1.msra.mxu0 0.0
        %1802 = vmatprep.subr.mxu0 0.0
        %1803 = vmatpush1.msra.mxu0 0.0
        %1804 = vmatprep.subr.mxu0 0.0
        %1805 = vmatpush1.msra.mxu0 0.0
        %1806 = vmatprep.subr.mxu0 0.0
        %1807 = vmatpush1.msra.mxu0 0.0
        %1808 = vmatprep.subr.mxu0 0.0
        %1809 = vmatpush1.msra.mxu0 0.0
        %1810 = vmatprep.subr.mxu0 0.0
        %1811 = vmatpush1.msra.mxu0 0.0
        %1812 = vmatprep.subr.mxu0 0.0
        %1813 = vmatpush1.msra.mxu0 0.0
        %1814 = vmatprep.subr.mxu0 0.0
        %1815 = vmatpush1.msra.mxu0 0.0
        %1816 = vmatprep.subr.mxu0 0.0
        %1817 = vmatpush1.msra.mxu0 0.0
        %1818 = vmatprep.subr.mxu0 0.0
        %1819 = vmatpush1.msra.mxu0 0.0
        %1820 = vmatprep.subr.mxu0 0.0
        %1821 = vmatpush1.msra.mxu0 0.0
        %1822 = vmatprep.subr.mxu0 0.0
        %1823 = vmatpush1.msra.mxu0 0.0
        %1824 = vmatprep.subr.mxu0 0.0
        %1825 = vmatpush1.msra.mxu0 0.0
        %1826 = vmatprep.subr.mxu0 0.0
        %1827 = vmatpush1.msra.mxu0 0.0
        %1828 = vmatprep.mubr.f32.mxu0 0.0
        %1829 = vmatmul.mubr.f32.gmra.mrb[0].mxu0 %v1618
        %v1830 = vpop.f32.mrb[0].mxu0
        %v1831 = vadd.f32 0.0, %v1830
        %v1832 = vpop.f32.mrb[0].mxu0
        %v1833 = vadd.f32 0.0, %v1832
        %1834 = vdwg.mxu0
        %1835 = vmatprep.subr.mxu0 %v305
        %1836 = vmatpush1.msra.mxu0 %v303
        %1837 = vmatprep.subr.mxu0 0.0
        %1838 = vmatpush1.msra.mxu0 0.0
        %1839 = vmatprep.subr.mxu0 0.0
        %1840 = vmatpush1.msra.mxu0 0.0
        %1841 = vmatprep.subr.mxu0 0.0
        %1842 = vmatpush1.msra.mxu0 0.0
        %1843 = vmatprep.subr.mxu0 0.0
        %1844 = vmatpush1.msra.mxu0 0.0
        %1845 = vmatprep.subr.mxu0 0.0
        %1846 = vmatpush1.msra.mxu0 0.0
        %1847 = vmatprep.subr.mxu0 0.0
        %1848 = vmatpush1.msra.mxu0 0.0
        %1849 = vmatprep.subr.mxu0 0.0
        %1850 = vmatpush1.msra.mxu0 0.0
        %1851 = vmatprep.subr.mxu0 0.0
        %1852 = vmatpush1.msra.mxu0 0.0
        %1853 = vmatprep.subr.mxu0 0.0
        %1854 = vmatpush1.msra.mxu0 0.0
        %1855 = vmatprep.subr.mxu0 0.0
        %1856 = vmatpush1.msra.mxu0 0.0
        %1857 = vmatprep.subr.mxu0 0.0
        %1858 = vmatpush1.msra.mxu0 0.0
        %1859 = vmatprep.subr.mxu0 0.0
        %1860 = vmatpush1.msra.mxu0 0.0
        %1861 = vmatprep.subr.mxu0 0.0
        %1862 = vmatpush1.msra.mxu0 0.0
        %1863 = vmatprep.subr.mxu0 0.0
        %1864 = vmatpush1.msra.mxu0 0.0
        %1865 = vmatprep.subr.mxu0 0.0
        %1866 = vmatpush1.msra.mxu0 0.0
        %1867 = vmatprep.subr.mxu0 0.0
        %1868 = vmatpush1.msra.mxu0 0.0
        %1869 = vmatprep.subr.mxu0 0.0
        %1870 = vmatpush1.msra.mxu0 0.0
        %1871 = vmatprep.subr.mxu0 0.0
        %1872 = vmatpush1.msra.mxu0 0.0
        %1873 = vmatprep.subr.mxu0 0.0
        %1874 = vmatpush1.msra.mxu0 0.0
        %1875 = vmatprep.subr.mxu0 0.0
        %1876 = vmatpush1.msra.mxu0 0.0
        %1877 = vmatprep.subr.mxu0 0.0
        %1878 = vmatpush1.msra.mxu0 0.0
        %1879 = vmatprep.subr.mxu0 0.0
        %1880 = vmatpush1.msra.mxu0 0.0
        %1881 = vmatprep.subr.mxu0 0.0
        %1882 = vmatpush1.msra.mxu0 0.0
        %1883 = vmatprep.subr.mxu0 0.0
        %1884 = vmatpush1.msra.mxu0 0.0
        %1885 = vmatprep.subr.mxu0 0.0
        %1886 = vmatpush1.msra.mxu0 0.0
        %1887 = vmatprep.subr.mxu0 0.0
        %1888 = vmatpush1.msra.mxu0 0.0
        %1889 = vmatprep.subr.mxu0 0.0
        %1890 = vmatpush1.msra.mxu0 0.0
        %1891 = vmatprep.subr.mxu0 0.0
        %1892 = vmatpush1.msra.mxu0 0.0
        %1893 = vmatprep.subr.mxu0 0.0
        %1894 = vmatpush1.msra.mxu0 0.0
        %1895 = vmatprep.subr.mxu0 0.0
        %1896 = vmatpush1.msra.mxu0 0.0
        %1897 = vmatprep.subr.mxu0 0.0
        %1898 = vmatpush1.msra.mxu0 0.0
        %1899 = vmatprep.mubr.f32.mxu0 0.0
        %1900 = vmatmul.mubr.f32.gmra.mrb[0].mxu0 %v1618
        %v1901 = vpop.f32.mrb[0].mxu0
        %v1902 = vadd.f32 0.0, %v1901
        %v1903 = vpop.f32.mrb[0].mxu0
        %v1904 = vadd.f32 0.0, %v1903
        %1905 = vdwg.mxu0
        %1906 = vmatprep.subr.mxu0 %v309
        %1907 = vmatpush1.msra.mxu0 %v307
        %1908 = vmatprep.subr.mxu0 0.0
        %1909 = vmatpush1.msra.mxu0 0.0
        %1910 = vmatprep.subr.mxu0 0.0
        %1911 = vmatpush1.msra.mxu0 0.0
        %1912 = vmatprep.subr.mxu0 0.0
        %1913 = vmatpush1.msra.mxu0 0.0
        %1914 = vmatprep.subr.mxu0 0.0
        %1915 = vmatpush1.msra.mxu0 0.0
        %1916 = vmatprep.subr.mxu0 0.0
        %1917 = vmatpush1.msra.mxu0 0.0
        %1918 = vmatprep.subr.mxu0 0.0
        %1919 = vmatpush1.msra.mxu0 0.0
        %1920 = vmatprep.subr.mxu0 0.0
        %1921 = vmatpush1.msra.mxu0 0.0
        %1922 = vmatprep.subr.mxu0 0.0
        %1923 = vmatpush1.msra.mxu0 0.0
        %1924 = vmatprep.subr.mxu0 0.0
        %1925 = vmatpush1.msra.mxu0 0.0
        %1926 = vmatprep.subr.mxu0 0.0
        %1927 = vmatpush1.msra.mxu0 0.0
        %1928 = vmatprep.subr.mxu0 0.0
        %1929 = vmatpush1.msra.mxu0 0.0
        %1930 = vmatprep.subr.mxu0 0.0
        %1931 = vmatpush1.msra.mxu0 0.0
        %1932 = vmatprep.subr.mxu0 0.0
        %1933 = vmatpush1.msra.mxu0 0.0
        %1934 = vmatprep.subr.mxu0 0.0
        %1935 = vmatpush1.msra.mxu0 0.0
        %1936 = vmatprep.subr.mxu0 0.0
        %1937 = vmatpush1.msra.mxu0 0.0
        %1938 = vmatprep.subr.mxu0 0.0
        %1939 = vmatpush1.msra.mxu0 0.0
        %1940 = vmatprep.subr.mxu0 0.0
        %1941 = vmatpush1.msra.mxu0 0.0
        %1942 = vmatprep.subr.mxu0 0.0
        %1943 = vmatpush1.msra.mxu0 0.0
        %1944 = vmatprep.subr.mxu0 0.0
        %1945 = vmatpush1.msra.mxu0 0.0
        %1946 = vmatprep.subr.mxu0 0.0
        %1947 = vmatpush1.msra.mxu0 0.0
        %1948 = vmatprep.subr.mxu0 0.0
        %1949 = vmatpush1.msra.mxu0 0.0
        %1950 = vmatprep.subr.mxu0 0.0
        %1951 = vmatpush1.msra.mxu0 0.0
        %1952 = vmatprep.subr.mxu0 0.0
        %1953 = vmatpush1.msra.mxu0 0.0
        %1954 = vmatprep.subr.mxu0 0.0
        %1955 = vmatpush1.msra.mxu0 0.0
        %1956 = vmatprep.subr.mxu0 0.0
        %1957 = vmatpush1.msra.mxu0 0.0
        %1958 = vmatprep.subr.mxu0 0.0
        %1959 = vmatpush1.msra.mxu0 0.0
        %1960 = vmatprep.subr.mxu0 0.0
        %1961 = vmatpush1.msra.mxu0 0.0
        %1962 = vmatprep.subr.mxu0 0.0
        %1963 = vmatpush1.msra.mxu0 0.0
        %1964 = vmatprep.subr.mxu0 0.0
        %1965 = vmatpush1.msra.mxu0 0.0
        %1966 = vmatprep.subr.mxu0 0.0
        %1967 = vmatpush1.msra.mxu0 0.0
        %1968 = vmatprep.subr.mxu0 0.0
        %1969 = vmatpush1.msra.mxu0 0.0
        %1970 = vmatprep.mubr.f32.mxu0 0.0
        %1971 = vmatmul.mubr.f32.gmra.mrb[0].mxu0 %v1618
        %v1972 = vpop.f32.mrb[0].mxu0
        %v1973 = vadd.f32 0.0, %v1972
        %v1974 = vpop.f32.mrb[0].mxu0
        %v1975 = vadd.f32 0.0, %v1974
        %1976 = vdwg.mxu0
        %1977 = vmatprep.subr.mxu0 %v1620
        %1978 = vmatpush1.msra.mxu0 %v1174
        %1979 = vmatprep.subr.mxu0 0.0
        %1980 = vmatpush1.msra.mxu0 0.0
        %1981 = vmatprep.subr.mxu0 0.0
        %1982 = vmatpush1.msra.mxu0 0.0
        %1983 = vmatprep.subr.mxu0 0.0
        %1984 = vmatpush1.msra.mxu0 0.0
        %1985 = vmatprep.subr.mxu0 0.0
        %1986 = vmatpush1.msra.mxu0 0.0
        %1987 = vmatprep.subr.mxu0 0.0
        %1988 = vmatpush1.msra.mxu0 0.0
        %1989 = vmatprep.subr.mxu0 0.0
        %1990 = vmatpush1.msra.mxu0 0.0
        %1991 = vmatprep.subr.mxu0 0.0
        %1992 = vmatpush1.msra.mxu0 0.0
        %1993 = vmatprep.subr.mxu0 0.0
        %1994 = vmatpush1.msra.mxu0 0.0
        %1995 = vmatprep.subr.mxu0 0.0
        %1996 = vmatpush1.msra.mxu0 0.0
        %1997 = vmatprep.subr.mxu0 0.0
        %1998 = vmatpush1.msra.mxu0 0.0
        %1999 = vmatprep.subr.mxu0 0.0
        %2000 = vmatpush1.msra.mxu0 0.0
        %2001 = vmatprep.subr.mxu0 0.0
        %2002 = vmatpush1.msra.mxu0 0.0
        %2003 = vmatprep.subr.mxu0 0.0
        %2004 = vmatpush1.msra.mxu0 0.0
        %2005 = vmatprep.subr.mxu0 0.0
        %2006 = vmatpush1.msra.mxu0 0.0
        %2007 = vmatprep.subr.mxu0 0.0
        %2008 = vmatpush1.msra.mxu0 0.0
        %2009 = vmatprep.subr.mxu0 0.0
        %2010 = vmatpush1.msra.mxu0 0.0
        %2011 = vmatprep.subr.mxu0 0.0
        %2012 = vmatpush1.msra.mxu0 0.0
        %2013 = vmatprep.subr.mxu0 0.0
        %2014 = vmatpush1.msra.mxu0 0.0
        %2015 = vmatprep.subr.mxu0 0.0
        %2016 = vmatpush1.msra.mxu0 0.0
        %2017 = vmatprep.subr.mxu0 0.0
        %2018 = vmatpush1.msra.mxu0 0.0
        %2019 = vmatprep.subr.mxu0 0.0
        %2020 = vmatpush1.msra.mxu0 0.0
        %2021 = vmatprep.subr.mxu0 0.0
        %2022 = vmatpush1.msra.mxu0 0.0
        %2023 = vmatprep.subr.mxu0 0.0
        %2024 = vmatpush1.msra.mxu0 0.0
        %2025 = vmatprep.subr.mxu0 0.0
        %2026 = vmatpush1.msra.mxu0 0.0
        %2027 = vmatprep.subr.mxu0 0.0
        %2028 = vmatpush1.msra.mxu0 0.0
        %2029 = vmatprep.subr.mxu0 0.0
        %2030 = vmatpush1.msra.mxu0 0.0
        %2031 = vmatprep.subr.mxu0 0.0
        %2032 = vmatpush1.msra.mxu0 0.0
        %2033 = vmatprep.subr.mxu0 0.0
        %2034 = vmatpush1.msra.mxu0 0.0
        %2035 = vmatprep.subr.mxu0 0.0
        %2036 = vmatpush1.msra.mxu0 0.0
        %2037 = vmatprep.subr.mxu0 0.0
        %2038 = vmatpush1.msra.mxu0 0.0
        %2039 = vmatprep.subr.mxu0 0.0
        %2040 = vmatpush1.msra.mxu0 0.0
        %2041 = vmatprep.mubr.f32.mxu0 0.0
        %2042 = vmatmul.mubr.f32.gmra.mrb[0].mxu0 %v1618
        %v2043 = vpop.f32.mrb[0].mxu0
        %v2044 = vadd.f32 0.0, %v2043
        %v2045 = vpop.f32.mrb[0].mxu0
        %v2046 = vadd.f32 0.0, %v2045
        %2047 = vdwg.mxu0
        %v2048 = vadd.f32 %v1602, %v1689
        %v2049 = vadd.f32 %v1603, %v1691
        %v2050 = vadd.f32 %v1604, %v1760
        %v2051 = vadd.f32 %v1605, %v1762
        %v2052 = vadd.f32 %v1606, %v1831
        %v2053 = vadd.f32 %v1607, %v1833
        %v2054 = vadd.f32 %v1608, %v1902
        %v2055 = vadd.f32 %v1609, %v1904
        %v2056 = vadd.f32 %v1610, %v1973
        %v2057 = vadd.f32 %v1611, %v1975
        %v2058 = vadd.f32 %v1612, %v2044
        %v2059 = vadd.f32 %v1613, %v2046
        %s2060 = scalar_lea.vmem %s3, 32
        %v2061 = vld [vmem:[%s2060] sm:$0xff]
        %v2062 = vcombine.high %v265, %v265
        %v2064 = vsel %vm282, %v2061, 0
        %v2066 = vsel %vm286, %v2062, 0
        %2068 = vmatprep.subr.mxu0 %v295
        %2069 = vmatpush1.msra.mxu0 %v293
        %2070 = vmatprep.subr.mxu0 0.0
        %2071 = vmatpush1.msra.mxu0 0.0
        %2072 = vmatprep.subr.mxu0 0.0
        %2073 = vmatpush1.msra.mxu0 0.0
        %2074 = vmatprep.subr.mxu0 0.0
        %2075 = vmatpush1.msra.mxu0 0.0
        %2076 = vmatprep.subr.mxu0 0.0
        %2077 = vmatpush1.msra.mxu0 0.0
        %2078 = vmatprep.subr.mxu0 0.0
        %2079 = vmatpush1.msra.mxu0 0.0
        %2080 = vmatprep.subr.mxu0 0.0
        %2081 = vmatpush1.msra.mxu0 0.0
        %2082 = vmatprep.subr.mxu0 0.0
        %2083 = vmatpush1.msra.mxu0 0.0
        %2084 = vmatprep.subr.mxu0 0.0
        %2085 = vmatpush1.msra.mxu0 0.0
        %2086 = vmatprep.subr.mxu0 0.0
        %2087 = vmatpush1.msra.mxu0 0.0
        %2088 = vmatprep.subr.mxu0 0.0
        %2089 = vmatpush1.msra.mxu0 0.0
        %2090 = vmatprep.subr.mxu0 0.0
        %2091 = vmatpush1.msra.mxu0 0.0
        %2092 = vmatprep.subr.mxu0 0.0
        %2093 = vmatpush1.msra.mxu0 0.0
        %2094 = vmatprep.subr.mxu0 0.0
        %2095 = vmatpush1.msra.mxu0 0.0
        %2096 = vmatprep.subr.mxu0 0.0
        %2097 = vmatpush1.msra.mxu0 0.0
        %2098 = vmatprep.subr.mxu0 0.0
        %2099 = vmatpush1.msra.mxu0 0.0
        %2100 = vmatprep.subr.mxu0 0.0
        %2101 = vmatpush1.msra.mxu0 0.0
        %2102 = vmatprep.subr.mxu0 0.0
        %2103 = vmatpush1.msra.mxu0 0.0
        %2104 = vmatprep.subr.mxu0 0.0
        %2105 = vmatpush1.msra.mxu0 0.0
        %2106 = vmatprep.subr.mxu0 0.0
        %2107 = vmatpush1.msra.mxu0 0.0
        %2108 = vmatprep.subr.mxu0 0.0
        %2109 = vmatpush1.msra.mxu0 0.0
        %2110 = vmatprep.subr.mxu0 0.0
        %2111 = vmatpush1.msra.mxu0 0.0
        %2112 = vmatprep.subr.mxu0 0.0
        %2113 = vmatpush1.msra.mxu0 0.0
        %2114 = vmatprep.subr.mxu0 0.0
        %2115 = vmatpush1.msra.mxu0 0.0
        %2116 = vmatprep.subr.mxu0 0.0
        %2117 = vmatpush1.msra.mxu0 0.0
        %2118 = vmatprep.subr.mxu0 0.0
        %2119 = vmatpush1.msra.mxu0 0.0
        %2120 = vmatprep.subr.mxu0 0.0
        %2121 = vmatpush1.msra.mxu0 0.0
        %2122 = vmatprep.subr.mxu0 0.0
        %2123 = vmatpush1.msra.mxu0 0.0
        %2124 = vmatprep.subr.mxu0 0.0
        %2125 = vmatpush1.msra.mxu0 0.0
        %2126 = vmatprep.subr.mxu0 0.0
        %2127 = vmatpush1.msra.mxu0 0.0
        %2128 = vmatprep.subr.mxu0 0.0
        %2129 = vmatpush1.msra.mxu0 0.0
        %2130 = vmatprep.subr.mxu0 0.0
        %2131 = vmatpush1.msra.mxu0 0.0
        %2132 = vmatprep.mubr.f32.mxu0 0.0
        %2133 = vmatmul.mubr.f32.gmra.mrb[0].mxu0 %v2064
        %v2134 = vpop.f32.mrb[0].mxu0
        %v2135 = vadd.f32 0.0, %v2134
        %v2136 = vpop.f32.mrb[0].mxu0
        %v2137 = vadd.f32 0.0, %v2136
        %2138 = vdwg.mxu0
        %2139 = vmatprep.subr.mxu0 %v299
        %2140 = vmatpush1.msra.mxu0 %v297
        %2141 = vmatprep.subr.mxu0 0.0
        %2142 = vmatpush1.msra.mxu0 0.0
        %2143 = vmatprep.subr.mxu0 0.0
        %2144 = vmatpush1.msra.mxu0 0.0
        %2145 = vmatprep.subr.mxu0 0.0
        %2146 = vmatpush1.msra.mxu0 0.0
        %2147 = vmatprep.subr.mxu0 0.0
        %2148 = vmatpush1.msra.mxu0 0.0
        %2149 = vmatprep.subr.mxu0 0.0
        %2150 = vmatpush1.msra.mxu0 0.0
        %2151 = vmatprep.subr.mxu0 0.0
        %2152 = vmatpush1.msra.mxu0 0.0
        %2153 = vmatprep.subr.mxu0 0.0
        %2154 = vmatpush1.msra.mxu0 0.0
        %2155 = vmatprep.subr.mxu0 0.0
        %2156 = vmatpush1.msra.mxu0 0.0
        %2157 = vmatprep.subr.mxu0 0.0
        %2158 = vmatpush1.msra.mxu0 0.0
        %2159 = vmatprep.subr.mxu0 0.0
        %2160 = vmatpush1.msra.mxu0 0.0
        %2161 = vmatprep.subr.mxu0 0.0
        %2162 = vmatpush1.msra.mxu0 0.0
        %2163 = vmatprep.subr.mxu0 0.0
        %2164 = vmatpush1.msra.mxu0 0.0
        %2165 = vmatprep.subr.mxu0 0.0
        %2166 = vmatpush1.msra.mxu0 0.0
        %2167 = vmatprep.subr.mxu0 0.0
        %2168 = vmatpush1.msra.mxu0 0.0
        %2169 = vmatprep.subr.mxu0 0.0
        %2170 = vmatpush1.msra.mxu0 0.0
        %2171 = vmatprep.subr.mxu0 0.0
        %2172 = vmatpush1.msra.mxu0 0.0
        %2173 = vmatprep.subr.mxu0 0.0
        %2174 = vmatpush1.msra.mxu0 0.0
        %2175 = vmatprep.subr.mxu0 0.0
        %2176 = vmatpush1.msra.mxu0 0.0
        %2177 = vmatprep.subr.mxu0 0.0
        %2178 = vmatpush1.msra.mxu0 0.0
        %2179 = vmatprep.subr.mxu0 0.0
        %2180 = vmatpush1.msra.mxu0 0.0
        %2181 = vmatprep.subr.mxu0 0.0
        %2182 = vmatpush1.msra.mxu0 0.0
        %2183 = vmatprep.subr.mxu0 0.0
        %2184 = vmatpush1.msra.mxu0 0.0
        %2185 = vmatprep.subr.mxu0 0.0
        %2186 = vmatpush1.msra.mxu0 0.0
        %2187 = vmatprep.subr.mxu0 0.0
        %2188 = vmatpush1.msra.mxu0 0.0
        %2189 = vmatprep.subr.mxu0 0.0
        %2190 = vmatpush1.msra.mxu0 0.0
        %2191 = vmatprep.subr.mxu0 0.0
        %2192 = vmatpush1.msra.mxu0 0.0
        %2193 = vmatprep.subr.mxu0 0.0
        %2194 = vmatpush1.msra.mxu0 0.0
        %2195 = vmatprep.subr.mxu0 0.0
        %2196 = vmatpush1.msra.mxu0 0.0
        %2197 = vmatprep.subr.mxu0 0.0
        %2198 = vmatpush1.msra.mxu0 0.0
        %2199 = vmatprep.subr.mxu0 0.0
        %2200 = vmatpush1.msra.mxu0 0.0
        %2201 = vmatprep.subr.mxu0 0.0
        %2202 = vmatpush1.msra.mxu0 0.0
        %2203 = vmatprep.mubr.f32.mxu0 0.0
        %2204 = vmatmul.mubr.f32.gmra.mrb[0].mxu0 %v2064
        %v2205 = vpop.f32.mrb[0].mxu0
        %v2206 = vadd.f32 0.0, %v2205
        %v2207 = vpop.f32.mrb[0].mxu0
        %v2208 = vadd.f32 0.0, %v2207
        %2209 = vdwg.mxu0
        %2210 = vmatprep.subr.mxu0 %v303
        %2211 = vmatpush1.msra.mxu0 %v301
        %2212 = vmatprep.subr.mxu0 0.0
        %2213 = vmatpush1.msra.mxu0 0.0
        %2214 = vmatprep.subr.mxu0 0.0
        %2215 = vmatpush1.msra.mxu0 0.0
        %2216 = vmatprep.subr.mxu0 0.0
        %2217 = vmatpush1.msra.mxu0 0.0
        %2218 = vmatprep.subr.mxu0 0.0
        %2219 = vmatpush1.msra.mxu0 0.0
        %2220 = vmatprep.subr.mxu0 0.0
        %2221 = vmatpush1.msra.mxu0 0.0
        %2222 = vmatprep.subr.mxu0 0.0
        %2223 = vmatpush1.msra.mxu0 0.0
        %2224 = vmatprep.subr.mxu0 0.0
        %2225 = vmatpush1.msra.mxu0 0.0
        %2226 = vmatprep.subr.mxu0 0.0
        %2227 = vmatpush1.msra.mxu0 0.0
        %2228 = vmatprep.subr.mxu0 0.0
        %2229 = vmatpush1.msra.mxu0 0.0
        %2230 = vmatprep.subr.mxu0 0.0
        %2231 = vmatpush1.msra.mxu0 0.0
        %2232 = vmatprep.subr.mxu0 0.0
        %2233 = vmatpush1.msra.mxu0 0.0
        %2234 = vmatprep.subr.mxu0 0.0
        %2235 = vmatpush1.msra.mxu0 0.0
        %2236 = vmatprep.subr.mxu0 0.0
        %2237 = vmatpush1.msra.mxu0 0.0
        %2238 = vmatprep.subr.mxu0 0.0
        %2239 = vmatpush1.msra.mxu0 0.0
        %2240 = vmatprep.subr.mxu0 0.0
        %2241 = vmatpush1.msra.mxu0 0.0
        %2242 = vmatprep.subr.mxu0 0.0
        %2243 = vmatpush1.msra.mxu0 0.0
        %2244 = vmatprep.subr.mxu0 0.0
        %2245 = vmatpush1.msra.mxu0 0.0
        %2246 = vmatprep.subr.mxu0 0.0
        %2247 = vmatpush1.msra.mxu0 0.0
        %2248 = vmatprep.subr.mxu0 0.0
        %2249 = vmatpush1.msra.mxu0 0.0
        %2250 = vmatprep.subr.mxu0 0.0
        %2251 = vmatpush1.msra.mxu0 0.0
        %2252 = vmatprep.subr.mxu0 0.0
        %2253 = vmatpush1.msra.mxu0 0.0
        %2254 = vmatprep.subr.mxu0 0.0
        %2255 = vmatpush1.msra.mxu0 0.0
        %2256 = vmatprep.subr.mxu0 0.0
        %2257 = vmatpush1.msra.mxu0 0.0
        %2258 = vmatprep.subr.mxu0 0.0
        %2259 = vmatpush1.msra.mxu0 0.0
        %2260 = vmatprep.subr.mxu0 0.0
        %2261 = vmatpush1.msra.mxu0 0.0
        %2262 = vmatprep.subr.mxu0 0.0
        %2263 = vmatpush1.msra.mxu0 0.0
        %2264 = vmatprep.subr.mxu0 0.0
        %2265 = vmatpush1.msra.mxu0 0.0
        %2266 = vmatprep.subr.mxu0 0.0
        %2267 = vmatpush1.msra.mxu0 0.0
        %2268 = vmatprep.subr.mxu0 0.0
        %2269 = vmatpush1.msra.mxu0 0.0
        %2270 = vmatprep.subr.mxu0 0.0
        %2271 = vmatpush1.msra.mxu0 0.0
        %2272 = vmatprep.subr.mxu0 0.0
        %2273 = vmatpush1.msra.mxu0 0.0
        %2274 = vmatprep.mubr.f32.mxu0 0.0
        %2275 = vmatmul.mubr.f32.gmra.mrb[0].mxu0 %v2064
        %v2276 = vpop.f32.mrb[0].mxu0
        %v2277 = vadd.f32 0.0, %v2276
        %v2278 = vpop.f32.mrb[0].mxu0
        %v2279 = vadd.f32 0.0, %v2278
        %2280 = vdwg.mxu0
        %2281 = vmatprep.subr.mxu0 %v307
        %2282 = vmatpush1.msra.mxu0 %v305
        %2283 = vmatprep.subr.mxu0 0.0
        %2284 = vmatpush1.msra.mxu0 0.0
        %2285 = vmatprep.subr.mxu0 0.0
        %2286 = vmatpush1.msra.mxu0 0.0
        %2287 = vmatprep.subr.mxu0 0.0
        %2288 = vmatpush1.msra.mxu0 0.0
        %2289 = vmatprep.subr.mxu0 0.0
        %2290 = vmatpush1.msra.mxu0 0.0
        %2291 = vmatprep.subr.mxu0 0.0
        %2292 = vmatpush1.msra.mxu0 0.0
        %2293 = vmatprep.subr.mxu0 0.0
        %2294 = vmatpush1.msra.mxu0 0.0
        %2295 = vmatprep.subr.mxu0 0.0
        %2296 = vmatpush1.msra.mxu0 0.0
        %2297 = vmatprep.subr.mxu0 0.0
        %2298 = vmatpush1.msra.mxu0 0.0
        %2299 = vmatprep.subr.mxu0 0.0
        %2300 = vmatpush1.msra.mxu0 0.0
        %2301 = vmatprep.subr.mxu0 0.0
        %2302 = vmatpush1.msra.mxu0 0.0
        %2303 = vmatprep.subr.mxu0 0.0
        %2304 = vmatpush1.msra.mxu0 0.0
        %2305 = vmatprep.subr.mxu0 0.0
        %2306 = vmatpush1.msra.mxu0 0.0
        %2307 = vmatprep.subr.mxu0 0.0
        %2308 = vmatpush1.msra.mxu0 0.0
        %2309 = vmatprep.subr.mxu0 0.0
        %2310 = vmatpush1.msra.mxu0 0.0
        %2311 = vmatprep.subr.mxu0 0.0
        %2312 = vmatpush1.msra.mxu0 0.0
        %2313 = vmatprep.subr.mxu0 0.0
        %2314 = vmatpush1.msra.mxu0 0.0
        %2315 = vmatprep.subr.mxu0 0.0
        %2316 = vmatpush1.msra.mxu0 0.0
        %2317 = vmatprep.subr.mxu0 0.0
        %2318 = vmatpush1.msra.mxu0 0.0
        %2319 = vmatprep.subr.mxu0 0.0
        %2320 = vmatpush1.msra.mxu0 0.0
        %2321 = vmatprep.subr.mxu0 0.0
        %2322 = vmatpush1.msra.mxu0 0.0
        %2323 = vmatprep.subr.mxu0 0.0
        %2324 = vmatpush1.msra.mxu0 0.0
        %2325 = vmatprep.subr.mxu0 0.0
        %2326 = vmatpush1.msra.mxu0 0.0
        %2327 = vmatprep.subr.mxu0 0.0
        %2328 = vmatpush1.msra.mxu0 0.0
        %2329 = vmatprep.subr.mxu0 0.0
        %2330 = vmatpush1.msra.mxu0 0.0
        %2331 = vmatprep.subr.mxu0 0.0
        %2332 = vmatpush1.msra.mxu0 0.0
        %2333 = vmatprep.subr.mxu0 0.0
        %2334 = vmatpush1.msra.mxu0 0.0
        %2335 = vmatprep.subr.mxu0 0.0
        %2336 = vmatpush1.msra.mxu0 0.0
        %2337 = vmatprep.subr.mxu0 0.0
        %2338 = vmatpush1.msra.mxu0 0.0
        %2339 = vmatprep.subr.mxu0 0.0
        %2340 = vmatpush1.msra.mxu0 0.0
        %2341 = vmatprep.subr.mxu0 0.0
        %2342 = vmatpush1.msra.mxu0 0.0
        %2343 = vmatprep.subr.mxu0 0.0
        %2344 = vmatpush1.msra.mxu0 0.0
        %2345 = vmatprep.mubr.f32.mxu0 0.0
        %2346 = vmatmul.mubr.f32.gmra.mrb[0].mxu0 %v2064
        %v2347 = vpop.f32.mrb[0].mxu0
        %v2348 = vadd.f32 0.0, %v2347
        %v2349 = vpop.f32.mrb[0].mxu0
        %v2350 = vadd.f32 0.0, %v2349
        %2351 = vdwg.mxu0
        %2352 = vmatprep.subr.mxu0 %v1174
        %2353 = vmatpush1.msra.mxu0 %v309
        %2354 = vmatprep.subr.mxu0 0.0
        %2355 = vmatpush1.msra.mxu0 0.0
        %2356 = vmatprep.subr.mxu0 0.0
        %2357 = vmatpush1.msra.mxu0 0.0
        %2358 = vmatprep.subr.mxu0 0.0
        %2359 = vmatpush1.msra.mxu0 0.0
        %2360 = vmatprep.subr.mxu0 0.0
        %2361 = vmatpush1.msra.mxu0 0.0
        %2362 = vmatprep.subr.mxu0 0.0
        %2363 = vmatpush1.msra.mxu0 0.0
        %2364 = vmatprep.subr.mxu0 0.0
        %2365 = vmatpush1.msra.mxu0 0.0
        %2366 = vmatprep.subr.mxu0 0.0
        %2367 = vmatpush1.msra.mxu0 0.0
        %2368 = vmatprep.subr.mxu0 0.0
        %2369 = vmatpush1.msra.mxu0 0.0
        %2370 = vmatprep.subr.mxu0 0.0
        %2371 = vmatpush1.msra.mxu0 0.0
        %2372 = vmatprep.subr.mxu0 0.0
        %2373 = vmatpush1.msra.mxu0 0.0
        %2374 = vmatprep.subr.mxu0 0.0
        %2375 = vmatpush1.msra.mxu0 0.0
        %2376 = vmatprep.subr.mxu0 0.0
        %2377 = vmatpush1.msra.mxu0 0.0
        %2378 = vmatprep.subr.mxu0 0.0
        %2379 = vmatpush1.msra.mxu0 0.0
        %2380 = vmatprep.subr.mxu0 0.0
        %2381 = vmatpush1.msra.mxu0 0.0
        %2382 = vmatprep.subr.mxu0 0.0
        %2383 = vmatpush1.msra.mxu0 0.0
        %2384 = vmatprep.subr.mxu0 0.0
        %2385 = vmatpush1.msra.mxu0 0.0
        %2386 = vmatprep.subr.mxu0 0.0
        %2387 = vmatpush1.msra.mxu0 0.0
        %2388 = vmatprep.subr.mxu0 0.0
        %2389 = vmatpush1.msra.mxu0 0.0
        %2390 = vmatprep.subr.mxu0 0.0
        %2391 = vmatpush1.msra.mxu0 0.0
        %2392 = vmatprep.subr.mxu0 0.0
        %2393 = vmatpush1.msra.mxu0 0.0
        %2394 = vmatprep.subr.mxu0 0.0
        %2395 = vmatpush1.msra.mxu0 0.0
        %2396 = vmatprep.subr.mxu0 0.0
        %2397 = vmatpush1.msra.mxu0 0.0
        %2398 = vmatprep.subr.mxu0 0.0
        %2399 = vmatpush1.msra.mxu0 0.0
        %2400 = vmatprep.subr.mxu0 0.0
        %2401 = vmatpush1.msra.mxu0 0.0
        %2402 = vmatprep.subr.mxu0 0.0
        %2403 = vmatpush1.msra.mxu0 0.0
        %2404 = vmatprep.subr.mxu0 0.0
        %2405 = vmatpush1.msra.mxu0 0.0
        %2406 = vmatprep.subr.mxu0 0.0
        %2407 = vmatpush1.msra.mxu0 0.0
        %2408 = vmatprep.subr.mxu0 0.0
        %2409 = vmatpush1.msra.mxu0 0.0
        %2410 = vmatprep.subr.mxu0 0.0
        %2411 = vmatpush1.msra.mxu0 0.0
        %2412 = vmatprep.subr.mxu0 0.0
        %2413 = vmatpush1.msra.mxu0 0.0
        %2414 = vmatprep.subr.mxu0 0.0
        %2415 = vmatpush1.msra.mxu0 0.0
        %2416 = vmatprep.mubr.f32.mxu0 0.0
        %2417 = vmatmul.mubr.f32.gmra.mrb[0].mxu0 %v2064
        %v2418 = vpop.f32.mrb[0].mxu0
        %v2419 = vadd.f32 0.0, %v2418
        %v2420 = vpop.f32.mrb[0].mxu0
        %v2421 = vadd.f32 0.0, %v2420
        %2422 = vdwg.mxu0
        %2423 = vmatprep.subr.mxu0 %v2066
        %2424 = vmatpush1.msra.mxu0 %v1620
        %2425 = vmatprep.subr.mxu0 0.0
        %2426 = vmatpush1.msra.mxu0 0.0
        %2427 = vmatprep.subr.mxu0 0.0
        %2428 = vmatpush1.msra.mxu0 0.0
        %2429 = vmatprep.subr.mxu0 0.0
        %2430 = vmatpush1.msra.mxu0 0.0
        %2431 = vmatprep.subr.mxu0 0.0
        %2432 = vmatpush1.msra.mxu0 0.0
        %2433 = vmatprep.subr.mxu0 0.0
        %2434 = vmatpush1.msra.mxu0 0.0
        %2435 = vmatprep.subr.mxu0 0.0
        %2436 = vmatpush1.msra.mxu0 0.0
        %2437 = vmatprep.subr.mxu0 0.0
        %2438 = vmatpush1.msra.mxu0 0.0
        %2439 = vmatprep.subr.mxu0 0.0
        %2440 = vmatpush1.msra.mxu0 0.0
        %2441 = vmatprep.subr.mxu0 0.0
        %2442 = vmatpush1.msra.mxu0 0.0
        %2443 = vmatprep.subr.mxu0 0.0
        %2444 = vmatpush1.msra.mxu0 0.0
        %2445 = vmatprep.subr.mxu0 0.0
        %2446 = vmatpush1.msra.mxu0 0.0
        %2447 = vmatprep.subr.mxu0 0.0
        %2448 = vmatpush1.msra.mxu0 0.0
        %2449 = vmatprep.subr.mxu0 0.0
        %2450 = vmatpush1.msra.mxu0 0.0
        %2451 = vmatprep.subr.mxu0 0.0
        %2452 = vmatpush1.msra.mxu0 0.0
        %2453 = vmatprep.subr.mxu0 0.0
        %2454 = vmatpush1.msra.mxu0 0.0
        %2455 = vmatprep.subr.mxu0 0.0
        %2456 = vmatpush1.msra.mxu0 0.0
        %2457 = vmatprep.subr.mxu0 0.0
        %2458 = vmatpush1.msra.mxu0 0.0
        %2459 = vmatprep.subr.mxu0 0.0
        %2460 = vmatpush1.msra.mxu0 0.0
        %2461 = vmatprep.subr.mxu0 0.0
        %2462 = vmatpush1.msra.mxu0 0.0
        %2463 = vmatprep.subr.mxu0 0.0
        %2464 = vmatpush1.msra.mxu0 0.0
        %2465 = vmatprep.subr.mxu0 0.0
        %2466 = vmatpush1.msra.mxu0 0.0
        %2467 = vmatprep.subr.mxu0 0.0
        %2468 = vmatpush1.msra.mxu0 0.0
        %2469 = vmatprep.subr.mxu0 0.0
        %2470 = vmatpush1.msra.mxu0 0.0
        %2471 = vmatprep.subr.mxu0 0.0
        %2472 = vmatpush1.msra.mxu0 0.0
        %2473 = vmatprep.subr.mxu0 0.0
        %2474 = vmatpush1.msra.mxu0 0.0
        %2475 = vmatprep.subr.mxu0 0.0
        %2476 = vmatpush1.msra.mxu0 0.0
        %2477 = vmatprep.subr.mxu0 0.0
        %2478 = vmatpush1.msra.mxu0 0.0
        %2479 = vmatprep.subr.mxu0 0.0
        %2480 = vmatpush1.msra.mxu0 0.0
        %2481 = vmatprep.subr.mxu0 0.0
        %2482 = vmatpush1.msra.mxu0 0.0
        %2483 = vmatprep.subr.mxu0 0.0
        %2484 = vmatpush1.msra.mxu0 0.0
        %2485 = vmatprep.subr.mxu0 0.0
        %2486 = vmatpush1.msra.mxu0 0.0
        %2487 = vmatprep.mubr.f32.mxu0 0.0
        %2488 = vmatmul.mubr.f32.gmra.mrb[0].mxu0 %v2064
        %v2489 = vpop.f32.mrb[0].mxu0
        %v2490 = vadd.f32 0.0, %v2489
        %v2491 = vpop.f32.mrb[0].mxu0
        %v2492 = vadd.f32 0.0, %v2491
        %2493 = vdwg.mxu0
        %v2494 = vadd.f32 %v2048, %v2135
        %v2495 = vadd.f32 %v2049, %v2137
        %v2496 = vadd.f32 %v2050, %v2206
        %v2497 = vadd.f32 %v2051, %v2208
        %v2498 = vadd.f32 %v2052, %v2277
        %v2499 = vadd.f32 %v2053, %v2279
        %v2500 = vadd.f32 %v2054, %v2348
        %v2501 = vadd.f32 %v2055, %v2350
        %v2502 = vadd.f32 %v2056, %v2419
        %v2503 = vadd.f32 %v2057, %v2421
        %v2504 = vadd.f32 %v2058, %v2490
        %v2505 = vadd.f32 %v2059, %v2492
        %2506 = vst [vmem:[%s202] sm:$0xff] %v2494
        %2507 = vst [vmem:[%s202 + $0x8] sm:$0xff] %v2495
        %2508 = vst [vmem:[%s202 + $0x10] sm:$0xff] %v2496
        %2509 = vst [vmem:[%s202 + $0x18] sm:$0xff] %v2497
        %2510 = vst [vmem:[%s202 + $0x20] sm:$0xff] %v2498
        %2511 = vst [vmem:[%s202 + $0x28] sm:$0xff] %v2499
        %2512 = vst [vmem:[%s202 + $0x30] sm:$0xff] %v2500
        %2513 = vst [vmem:[%s202 + $0x38] sm:$0xff] %v2501
        %2514 = vst [vmem:[%s202 + $0x40] sm:$0xff] %v2502
        %2515 = vst [vmem:[%s202 + $0x48] sm:$0xff] %v2503
        %2516 = vst [vmem:[%s202 + $0x50] sm:$0xff] %v2504
        %2517 = vst [vmem:[%s202 + $0x58] sm:$0xff] %v2505
        %s2518 = sand.u32 %s127, 1
        %s2519 = scalar_lea.sflag [#allocation3], %s2518
        %s2520 = sand.u32 %s127, 1
        %s2521 = smul.addr %s2520, 96
        %s2522 = scalar_lea.vmem [#allocation2], %s2521
        // Predicated region
        $region37: #{frame_feature_forward.1} parent=35 // pred_check
          %p2523 = pneg %p137
        $region38: #{frame_feature_forward.1} parent=35 // pred_check_branch
          %2525 = sbr.rel (%p2523) target = $region40
        $region39: #{frame_feature_forward.1} parent=35 // pred_region
          %s2527 = ssub.s32 1536, 1536
          %2528 = vsyncadd %s2519, %s2527
          %s2529 = smul.addr %s22, 12
          %s2530 = smul.addr %s2529, 128
          %s2531 = scalar_lea.hbm %s4, %s2530
          %s2533 = sshll.u32 %s2522, 4
          %s2534 = int_to_ptr.vmem [resolvable:$true] %s2533
          %2536 = dma.vmem_to_hbm [thread:$0]  %s2534, 1536, %s2531, %s2519
        $region40: #{frame_feature_forward.1} parent=35 // pred_fallthru
          _
      $region36: #{frame_feature_forward.1} parent=5 // pred_fallthru
        _
      %p2537 = scmp.le.s32.totalorder 2, %s13
      // Predicated region
      $region41: #{frame_feature_forward.1} parent=5 // pred_check
        %p2538 = pneg %p2537
      $region42: #{frame_feature_forward.1} parent=5 // pred_check_branch
        %2540 = sbr.rel (%p2538) target = $region44
      $region43: #{frame_feature_forward.1} parent=5 // pred_region
        %s2541 = ssub.s32 %s13, 2
        // Predicated region
        $region45: #{frame_feature_forward.1} parent=43 // pred_check
          %p2542 = pneg %p143
        $region46: #{frame_feature_forward.1} parent=43 // pred_check_branch
          %2544 = sbr.rel (%p2542) target = $region48
        $region47: #{frame_feature_forward.1} parent=43 // pred_region
          %s2545 = sand.u32 %s128, 1
          %s2546 = scalar_lea.sflag [#allocation3], %s2545
          %s2547 = sand.u32 %s128, 1
          %s2548 = smul.addr %s2547, 96
          %s2549 = scalar_lea.vmem [#allocation2], %s2548
          %2550 = dma.done %s2546, 1536
        $region48: #{frame_feature_forward.1} parent=43 // pred_fallthru
          _
      $region44: #{frame_feature_forward.1} parent=5 // pred_fallthru
        _
    $region6: #{frame_feature_forward.1} parent=1 // loop_footer
      %s17 = sadd.s32 1, %s13
    $region7: #{frame_feature_forward.1} parent=1 // loop_footer_branch
      %12 = sbr.rel target = $region3
    $region8: #{frame_feature_forward.1} parent=1 // loop_exit
      _
    %2551 = vsyncpa [#allocation3], 1
    %s2552 = scalar_lea.sflag [#allocation3], 1
    %2553 = vsyncpa %s2552, 1

</llo_original>
